<compile_context>
chip_gen: v5e
topology: v5e:2x2
jax: 0.10.0
libtpu: 0.0.40
codegen_flags: <defaults>
</compile_context>

<pallas_src>
import functools

import jax
import jax.numpy as jnp
from jax.experimental import pallas as pl
from jax.experimental.pallas import tpu as pltpu


def _round_up(v: int, m: int) -> int:
    return (v + m - 1) // m * m


# ----------------------------------------------------------------------------
# Kernel A: fused node transform + attention projections (batched relations).
# ----------------------------------------------------------------------------
def _node_transform_kernel(x_ref, w_ref, s_ref, xw_ref, sc_ref):
    x = x_ref[...]                                            # (tm, F) bf16
    xw_ref[...] = jnp.dot(x, w_ref[...], preferred_element_type=jnp.float32)
    sc_ref[...] = jnp.dot(x, s_ref[...], preferred_element_type=jnp.float32)


def node_transform(x_pad, w_cat, s_cat, *, tm):
    """x_pad: (N_pad, F) bf16; w_cat: (F, R*HC) bf16; s_cat: (F, 2*R*H) bf16."""
    N_pad, F = x_pad.shape
    RHC = w_cat.shape[1]
    S = s_cat.shape[1]
    return pl.pallas_call(
        _node_transform_kernel,
        out_shape=(jax.ShapeDtypeStruct((N_pad, RHC), jnp.float32),
                   jax.ShapeDtypeStruct((N_pad, S), jnp.float32)),
        grid=(N_pad // tm,),
        in_specs=[
            pl.BlockSpec((tm, F), lambda i: (i, 0)),
            pl.BlockSpec((F, RHC), lambda i: (0, 0)),
            pl.BlockSpec((F, S), lambda i: (0, 0)),
        ],
        out_specs=(
            pl.BlockSpec((tm, RHC), lambda i: (i, 0)),
            pl.BlockSpec((tm, S), lambda i: (i, 0)),
        ),
        compiler_params=pltpu.CompilerParams(dimension_semantics=("parallel",)),
    )(x_pad, w_cat, s_cat)


# ----------------------------------------------------------------------------
# Kernel B: edge-tiled message multiply + segment scatter-add + bias (+ReLU).
# dst indices arrive via scalar prefetch (SMEM); output accumulator is resident
# in VMEM across the edge-tile grid axis (init / finalize with pl.when).
# ----------------------------------------------------------------------------
def _segment_attention_kernel(dst_ref, alpha_ref, xwj_ref, bias_ref, o_ref,
                              msg_ref, *, tile_e, apply_relu):
    e0 = pl.program_id(0)

    @pl.when(e0 == 0)
    def _init():
        o_ref[...] = jnp.zeros_like(o_ref)

    # lane-dense per-edge messages for this tile: (tile_e, 1, HC)
    msg_ref[...] = alpha_ref[...] * xwj_ref[...]

    base = e0 * tile_e

    def body(t, carry):
        d = dst_ref[base + t]                                  # scalar from SMEM
        o_ref[pl.ds(d, 1)] = o_ref[pl.ds(d, 1)] + msg_ref[pl.ds(t, 1)]
        return carry

    jax.lax.fori_loop(0, tile_e, body, 0)

    @pl.when(e0 == pl.num_programs(0) - 1)
    def _finalize():
        out = o_ref[...] + bias_ref[...]
        if apply_relu:
            out = jnp.maximum(out, 0.0)
        o_ref[...] = out


def segment_attention(dst_pad, alpha3, xwj3, bias3, num_nodes, *, tile_e,
                      apply_relu):
    E_pad, _, HC = alpha3.shape
    kernel = functools.partial(_segment_attention_kernel,
                               tile_e=tile_e, apply_relu=apply_relu)
    return pl.pallas_call(
        kernel,
        out_shape=jax.ShapeDtypeStruct((num_nodes, 1, HC), jnp.float32),
        grid_spec=pltpu.PrefetchScalarGridSpec(
            num_scalar_prefetch=1,
            grid=(E_pad // tile_e,),
            in_specs=[
                pl.BlockSpec((tile_e, 1, HC), lambda e, dst: (e, 0, 0)),
                pl.BlockSpec((tile_e, 1, HC), lambda e, dst: (e, 0, 0)),
                pl.BlockSpec((1, 1, HC), lambda e, dst: (0, 0, 0)),
            ],
            out_specs=pl.BlockSpec((num_nodes, 1, HC),
                                   lambda e, dst: (0, 0, 0)),
            scratch_shapes=[pltpu.VMEM((tile_e, 1, HC), jnp.float32)],
        ),
        compiler_params=pltpu.CompilerParams(dimension_semantics=("arbitrary",)),
    )(dst_pad, alpha3, xwj3, bias3)


# ----------------------------------------------------------------------------
# One RGATConv layer
# ----------------------------------------------------------------------------
def rgat_layer(x, edge_index, edge_type, params, *, heads, apply_relu):
    """x: (N, F) f32 -> (N, heads * out_channels) f32."""
    W, Q, K, b = params["w"], params["q"], params["k"], params["b"]
    R, F, HC = W.shape
    H = heads
    C = HC // H
    N = x.shape[0]
    E = edge_index.shape[1]
    src, dst = edge_index[0], edge_index[1]

    # parameter preprocessing (constant under jit): batch relations, fold Q/K
    w_cat = jnp.transpose(W, (1, 0, 2)).reshape(F, R * HC)
    wq = jnp.einsum("rfc,ch->rfh", W, Q)          # (R, F, H)
    wk = jnp.einsum("rfc,ch->rfh", W, K)
    s_cat = jnp.concatenate(
        [jnp.transpose(wq, (1, 0, 2)).reshape(F, R * H),
         jnp.transpose(wk, (1, 0, 2)).reshape(F, R * H)], axis=1)

    # ---- Kernel A: node-level transform + attention scores (bf16 MXU) ----
    N8 = _round_up(N, 8)
    tm = min(256, N8)
    N_pad = _round_up(N8, tm)
    x_pad = jnp.pad(x, ((0, N_pad - N), (0, 0))).astype(jnp.bfloat16)
    xw_cat, sc = node_transform(x_pad, w_cat.astype(jnp.bfloat16),
                                s_cat.astype(jnp.bfloat16), tm=tm)
    xw3 = xw_cat.reshape(N_pad, R, HC)
    sq = sc[:, :R * H].reshape(N_pad, R, H)
    sk = sc[:, R * H:].reshape(N_pad, R, H)

    # ---- XLA glue: per-edge gathers + O(E*H) segment softmax statistics ----
    # TODO(synk): fuse these row gathers / segment stats into the Pallas kernel
    # (manual DMA gather) instead of materializing (E, HC) edge tensors in HBM.
    qi = sq[dst, edge_type]                       # (E, H)  destination score
    kj = sk[src, edge_type]                       # (E, H)  source score
    z = qi + kj
    logits = jnp.where(z >= 0, z, 0.2 * z)        # leaky_relu(0.2)
    seg_max = jax.ops.segment_max(logits, dst, num_segments=N)   # per-dst max
    p = jnp.exp(logits - seg_max[dst])
    denom = jax.ops.segment_sum(p, dst, num_segments=N)
    alpha = p / denom[dst]                        # (E, H)
    alpha_full = jnp.repeat(alpha, C, axis=1)     # (E, HC) lane-dense weights
    xw_j = xw3[src, edge_type]                    # (E, HC) source messages

    # ---- Kernel B: message multiply + segment scatter-add + bias (+relu) ----
    E8 = _round_up(E, 8)
    tile_e = min(512, E8)
    E_pad = _round_up(E8, tile_e)
    pad_e = E_pad - E
    alpha3 = jnp.pad(alpha_full, ((0, pad_e), (0, 0)))[:, None, :]  # pads -> 0
    xwj3 = jnp.pad(xw_j, ((0, pad_e), (0, 0)))[:, None, :]
    dst_pad = jnp.pad(dst.astype(jnp.int32), (0, pad_e))
    bias3 = b.reshape(1, 1, HC).astype(jnp.float32)

    out = segment_attention(dst_pad, alpha3, xwj3, bias3, N,
                            tile_e=tile_e, apply_relu=apply_relu)
    # TODO(synk): for very large N, additionally tile the node accumulator
    # (CSR offsets per node tile) instead of keeping (N,1,HC) VMEM-resident.
    return out[:, 0, :]                           # (N, HC)


# ----------------------------------------------------------------------------
# Model: LinkLevelRGAT.forward  (num_layers=2, heads=4 then 1, relu between)
# ----------------------------------------------------------------------------
def link_level_rgat_forward(x, edge_index, edge_type, params):
    h = rgat_layer(x, edge_index, edge_type, params["layer0"],
                   heads=4, apply_relu=True)
    # TODO(synk): F.dropout between layers omitted (identity in eval/inference).
    h = rgat_layer(h, edge_index, edge_type, params["layer1"],
                   heads=1, apply_relu=False)
    return h


def _glorot(key, shape):
    fan_in, fan_out = shape[-2], shape[-1]
    limit = (6.0 / (fan_in + fan_out)) ** 0.5
    return jax.random.uniform(key, shape, jnp.float32, -limit, limit)


def init_params(key, in_channels=384, hidden_channels=128, num_heads=4,
                num_relations=3):
    ks = jax.random.split(key, 6)
    c0 = hidden_channels // num_heads
    layer0 = dict(
        w=_glorot(ks[0], (num_relations, in_channels, num_heads * c0)),
        q=_glorot(ks[1], (num_heads * c0, num_heads)),
        k=_glorot(ks[2], (num_heads * c0, num_heads)),
        b=jnp.zeros((num_heads * c0,), jnp.float32),
    )
    layer1 = dict(
        w=_glorot(ks[3], (num_relations, hidden_channels, hidden_channels)),
        q=_glorot(ks[4], (hidden_channels, 1)),
        k=_glorot(ks[5], (hidden_channels, 1)),
        b=jnp.zeros((hidden_channels,), jnp.float32),
    )
    return dict(layer0=layer0, layer1=layer1)


if __name__ == "__main__":
    key = jax.random.PRNGKey(0)
    kx, ks, kd, kt, kp = jax.random.split(key, 5)

    N, E = 16, 32                       # nodes, edges
    in_channels, hidden_channels = 384, 128
    num_relations = 3

    x = jax.random.normal(kx, (N, in_channels), dtype=jnp.float32)
    src = jax.random.randint(ks, (E,), 0, N, dtype=jnp.int32)
    dst = jax.random.randint(kd, (E,), 0, N, dtype=jnp.int32)
    edge_index = jnp.stack([src, dst])                  # (2, E)
    edge_type = jax.random.randint(kt, (E,), 0, num_relations, dtype=jnp.int32)

    params = init_params(kp, in_channels, hidden_channels, 4, num_relations)

    fwd = jax.jit(lambda x, ei, et: link_level_rgat_forward(x, ei, et, params))
    out = fwd(x, edge_index, edge_type)                 # (N, hidden_channels)
    jax.block_until_ready(out)
    assert out.shape == (N, hidden_channels)
    assert bool(jnp.all(jnp.isfinite(out)))
    print("KERNEL_OK")
</pallas_src>

<mosaic_0001>
module attributes {stable_mosaic.version = 11 : i64} {
  func.func @_node_transform_kernel(%arg0: i32, %arg1: memref<16x384xbf16, #tpu.memory_space<vmem>>, %arg2: memref<384x384xbf16, #tpu.memory_space<vmem>>, %arg3: memref<384x24xbf16, #tpu.memory_space<vmem>>, %arg4: memref<16x384xf32, #tpu.memory_space<vmem>>, %arg5: memref<16x24xf32, #tpu.memory_space<vmem>>) attributes {dimension_semantics = [#tpu.dimension_semantics<parallel>], iteration_bounds = array<i64: 1>, scalar_prefetch = 0 : i64, scratch_operands = 0 : i64, tpu.core_type = #tpu.core_type<tc>, window_params = [{transform_indices = @transform_0, window_bounds = array<i64: 16, 384>}, {pipeline_mode = #tpu.pipeline_mode<synchronous>, transform_indices = @transform_1, window_bounds = array<i64: 384, 384>}, {pipeline_mode = #tpu.pipeline_mode<synchronous>, transform_indices = @transform_2, window_bounds = array<i64: 384, 24>}, {transform_indices = @transform_3, window_bounds = array<i64: 16, 384>}, {transform_indices = @transform_4, window_bounds = array<i64: 16, 24>}]} {
    %c0 = arith.constant 0 : index
    %c0_0 = arith.constant 0 : index
    %0 = vector.load %arg1[%c0, %c0_0] : memref<16x384xbf16, #tpu.memory_space<vmem>>, vector<16x384xbf16>
    %c0_1 = arith.constant 0 : index
    %c0_2 = arith.constant 0 : index
    %1 = vector.load %arg2[%c0_1, %c0_2] : memref<384x384xbf16, #tpu.memory_space<vmem>>, vector<384x384xbf16>
    %cst = arith.constant dense<0.000000e+00> : vector<16x384xf32>
    %2 = tpu.matmul %0, %1, %cst {dimension_numbers = #tpu.dot_dimension_numbers<[1], [0], [0], [1], [0, 0, 1, 1], [], []>} : vector<16x384xbf16>, vector<384x384xbf16>, vector<16x384xf32> -> vector<16x384xf32>
    %c0_3 = arith.constant 0 : index
    %c0_4 = arith.constant 0 : index
    %3 = vector.load %arg4[%c0_3, %c0_4] : memref<16x384xf32, #tpu.memory_space<vmem>>, vector<16x384xf32>
    tpu.vector_store %arg4[%c0_3, %c0_4], %2 {strides = array<i32>} : memref<16x384xf32, #tpu.memory_space<vmem>>, vector<16x384xf32>,
    %c0_5 = arith.constant 0 : index
    %c0_6 = arith.constant 0 : index
    %4 = vector.load %arg3[%c0_5, %c0_6] : memref<384x24xbf16, #tpu.memory_space<vmem>>, vector<384x24xbf16>
    %cst_7 = arith.constant dense<0.000000e+00> : vector<16x24xf32>
    %5 = tpu.matmul %0, %4, %cst_7 {dimension_numbers = #tpu.dot_dimension_numbers<[1], [0], [0], [1], [0, 0, 1, 1], [], []>} : vector<16x384xbf16>, vector<384x24xbf16>, vector<16x24xf32> -> vector<16x24xf32>
    %c0_8 = arith.constant 0 : index
    %c0_9 = arith.constant 0 : index
    %6 = vector.load %arg5[%c0_8, %c0_9] : memref<16x24xf32, #tpu.memory_space<vmem>>, vector<16x24xf32>
    tpu.vector_store %arg5[%c0_8, %c0_9], %5 {strides = array<i32>} : memref<16x24xf32, #tpu.memory_space<vmem>>, vector<16x24xf32>,
    return
  }
  func.func @transform_0(%arg0: i32) -> (i32, i32) {
    %c0_i32 = arith.constant 0 : i32
    %c0_i32_0 = arith.constant 0 : i32
    return %arg0, %c0_i32 : i32, i32
  }
  func.func @transform_1(%arg0: i32) -> (i32, i32) {
    %c0_i32 = arith.constant 0 : i32
    %c0_i32_0 = arith.constant 0 : i32
    %c0_i32_1 = arith.constant 0 : i32
    return %c0_i32, %c0_i32_0 : i32, i32
  }
  func.func @transform_2(%arg0: i32) -> (i32, i32) {
    %c0_i32 = arith.constant 0 : i32
    %c0_i32_0 = arith.constant 0 : i32
    %c0_i32_1 = arith.constant 0 : i32
    return %c0_i32, %c0_i32_0 : i32, i32
  }
  func.func @transform_3(%arg0: i32) -> (i32, i32) {
    %c0_i32 = arith.constant 0 : i32
    %c0_i32_0 = arith.constant 0 : i32
    return %arg0, %c0_i32 : i32, i32
  }
  func.func @transform_4(%arg0: i32) -> (i32, i32) {
    %c0_i32 = arith.constant 0 : i32
    %c0_i32_0 = arith.constant 0 : i32
    return %arg0, %c0_i32 : i32, i32
  }
}

module attributes {stable_mosaic.version = 11 : i64} {
  func.func @_segment_attention_kernel(%arg0: i32, %arg1: memref<32xi32, #tpu.memory_space<smem>>, %arg2: memref<32x1x128xf32, #tpu.memory_space<vmem>>, %arg3: memref<32x1x128xf32, #tpu.memory_space<vmem>>, %arg4: memref<1x1x128xf32, #tpu.memory_space<vmem>>, %arg5: memref<16x1x128xf32, #tpu.memory_space<vmem>>, %arg6: memref<32x1x128xf32, #tpu.memory_space<vmem>>) attributes {dimension_semantics = [#tpu.dimension_semantics<arbitrary>], iteration_bounds = array<i64: 1>, scalar_prefetch = 1 : i64, scratch_operands = 1 : i64, tpu.core_type = #tpu.core_type<tc>, window_params = [{transform_indices = @transform_0, window_bounds = array<i64: 32, 1, 128>}, {transform_indices = @transform_1, window_bounds = array<i64: 32, 1, 128>}, {pipeline_mode = #tpu.pipeline_mode<synchronous>, transform_indices = @transform_2, window_bounds = array<i64: 1, 1, 128>}, {pipeline_mode = #tpu.pipeline_mode<synchronous>, transform_indices = @transform_3, window_bounds = array<i64: 16, 1, 128>}]} {
    %c0_i32 = arith.constant 0 : i32
    %0 = arith.cmpi eq, %arg0, %c0_i32 : i32
    %1 = arith.extui %0 : i1 to i32
    %c0_i32_0 = arith.constant 0 : i32
    %2 = arith.cmpi ne, %1, %c0_i32_0 : i32
    scf.if %2 {
      %cst = arith.constant 0.000000e+00 : f32
      %12 = vector.broadcast %cst : f32 to vector<16x1x128xf32>
      %c0_14 = arith.constant 0 : index
      %c0_15 = arith.constant 0 : index
      %c0_16 = arith.constant 0 : index
      %13 = vector.load %arg5[%c0_14, %c0_15, %c0_16] : memref<16x1x128xf32, #tpu.memory_space<vmem>>, vector<16x1x128xf32>
      tpu.vector_store %arg5[%c0_14, %c0_15, %c0_16], %12 {strides = array<i32>} : memref<16x1x128xf32, #tpu.memory_space<vmem>>, vector<16x1x128xf32>,
    } else {
    }
    %c0 = arith.constant 0 : index
    %c0_1 = arith.constant 0 : index
    %c0_2 = arith.constant 0 : index
    %3 = vector.load %arg2[%c0, %c0_1, %c0_2] : memref<32x1x128xf32, #tpu.memory_space<vmem>>, vector<32x1x128xf32>
    %c0_3 = arith.constant 0 : index
    %c0_4 = arith.constant 0 : index
    %c0_5 = arith.constant 0 : index
    %4 = vector.load %arg3[%c0_3, %c0_4, %c0_5] : memref<32x1x128xf32, #tpu.memory_space<vmem>>, vector<32x1x128xf32>
    %5 = arith.mulf %3, %4 : vector<32x1x128xf32>
    %c0_6 = arith.constant 0 : index
    %c0_7 = arith.constant 0 : index
    %c0_8 = arith.constant 0 : index
    %6 = vector.load %arg6[%c0_6, %c0_7, %c0_8] : memref<32x1x128xf32, #tpu.memory_space<vmem>>, vector<32x1x128xf32>
    tpu.vector_store %arg6[%c0_6, %c0_7, %c0_8], %5 {strides = array<i32>} : memref<32x1x128xf32, #tpu.memory_space<vmem>>, vector<32x1x128xf32>,
    %c32_i32 = arith.constant 32 : i32
    %7 = arith.muli %arg0, %c32_i32 : i32
    %c0_i32_9 = arith.constant 0 : i32
    %c32_i32_10 = arith.constant 32 : i32
    %8 = arith.addi %c0_i32_9, %c32_i32_10 : i32
    %c1_i32 = arith.constant 1 : i32
    scf.for %arg7 = %c0_i32_9 to %8 step %c1_i32  : i32 {
      %12 = arith.addi %7, %arg7 : i32
      %13 = arith.index_cast %12 : i32 to index
      %14 = memref.load %arg1[%13] : memref<32xi32, #tpu.memory_space<smem>>
      %15 = arith.index_cast %14 : i32 to index
      %c0_14 = arith.constant 0 : index
      %c0_15 = arith.constant 0 : index
      %16 = vector.load %arg5[%15, %c0_14, %c0_15] : memref<16x1x128xf32, #tpu.memory_space<vmem>>, vector<1x1x128xf32>
      %17 = arith.index_cast %arg7 : i32 to index
      %c0_16 = arith.constant 0 : index
      %c0_17 = arith.constant 0 : index
      %18 = vector.load %arg6[%17, %c0_16, %c0_17] : memref<32x1x128xf32, #tpu.memory_space<vmem>>, vector<1x1x128xf32>
      %19 = arith.addf %16, %18 : vector<1x1x128xf32>
      %20 = arith.index_cast %14 : i32 to index
      %c0_18 = arith.constant 0 : index
      %c0_19 = arith.constant 0 : index
      %21 = vector.load %arg5[%20, %c0_18, %c0_19] : memref<16x1x128xf32, #tpu.memory_space<vmem>>, vector<1x1x128xf32>
      tpu.vector_store %arg5[%20, %c0_18, %c0_19], %19 {strides = array<i32>} : memref<16x1x128xf32, #tpu.memory_space<vmem>>, vector<1x1x128xf32>,
    }
    %c32_i32_11 = arith.constant 32 : i32
    %c0_i32_12 = arith.constant 0 : i32
    %9 = arith.cmpi eq, %arg0, %c0_i32_12 : i32
    %10 = arith.extui %9 : i1 to i32
    %c0_i32_13 = arith.constant 0 : i32
    %11 = arith.cmpi ne, %10, %c0_i32_13 : i32
    scf.if %11 {
      %c0_14 = arith.constant 0 : index
      %c0_15 = arith.constant 0 : index
      %c0_16 = arith.constant 0 : index
      %12 = vector.load %arg5[%c0_14, %c0_15, %c0_16] : memref<16x1x128xf32, #tpu.memory_space<vmem>>, vector<16x1x128xf32>
      %c0_17 = arith.constant 0 : index
      %c0_18 = arith.constant 0 : index
      %c0_19 = arith.constant 0 : index
      %13 = vector.load %arg4[%c0_17, %c0_18, %c0_19] : memref<1x1x128xf32, #tpu.memory_space<vmem>>, vector<1x1x128xf32>
      %14 = vector.broadcast %13 : vector<1x1x128xf32> to vector<16x1x128xf32>
      %15 = arith.addf %12, %14 : vector<16x1x128xf32>
      %cst = arith.constant 0.000000e+00 : f32
      %16 = vector.broadcast %cst : f32 to vector<16x1x128xf32>
      %17 = arith.maximumf %15, %16 : vector<16x1x128xf32>
      %c0_20 = arith.constant 0 : index
      %c0_21 = arith.constant 0 : index
      %c0_22 = arith.constant 0 : index
      %18 = vector.load %arg5[%c0_20, %c0_21, %c0_22] : memref<16x1x128xf32, #tpu.memory_space<vmem>>, vector<16x1x128xf32>
      tpu.vector_store %arg5[%c0_20, %c0_21, %c0_22], %17 {strides = array<i32>} : memref<16x1x128xf32, #tpu.memory_space<vmem>>, vector<16x1x128xf32>,
    } else {
    }
    return
  }
  func.func @transform_0(%arg0: i32, %arg1: memref<32xi32, #tpu.memory_space<smem>>) -> (i32, i32, i32) {
    %c0_i32 = arith.constant 0 : i32
    %c0_i32_0 = arith.constant 0 : i32
    %c0_i32_1 = arith.constant 0 : i32
    return %arg0, %c0_i32, %c0_i32_0 : i32, i32, i32
  }
  func.func @transform_1(%arg0: i32, %arg1: memref<32xi32, #tpu.memory_space<smem>>) -> (i32, i32, i32) {
    %c0_i32 = arith.constant 0 : i32
    %c0_i32_0 = arith.constant 0 : i32
    %c0_i32_1 = arith.constant 0 : i32
    return %arg0, %c0_i32, %c0_i32_0 : i32, i32, i32
  }
  func.func @transform_2(%arg0: i32, %arg1: memref<32xi32, #tpu.memory_space<smem>>) -> (i32, i32, i32) {
    %c0_i32 = arith.constant 0 : i32
    %c0_i32_0 = arith.constant 0 : i32
    %c0_i32_1 = arith.constant 0 : i32
    %c0_i32_2 = arith.constant 0 : i32
    return %c0_i32, %c0_i32_0, %c0_i32_1 : i32, i32, i32
  }
  func.func @transform_3(%arg0: i32, %arg1: memref<32xi32, #tpu.memory_space<smem>>) -> (i32, i32, i32) {
    %c0_i32 = arith.constant 0 : i32
    %c0_i32_0 = arith.constant 0 : i32
    %c0_i32_1 = arith.constant 0 : i32
    %c0_i32_2 = arith.constant 0 : i32
    return %c0_i32, %c0_i32_0, %c0_i32_1 : i32, i32, i32
  }
}

module attributes {stable_mosaic.version = 11 : i64} {
  func.func @_node_transform_kernel(%arg0: i32, %arg1: memref<16x128xbf16, #tpu.memory_space<vmem>>, %arg2: memref<128x384xbf16, #tpu.memory_space<vmem>>, %arg3: memref<128x6xbf16, #tpu.memory_space<vmem>>, %arg4: memref<16x384xf32, #tpu.memory_space<vmem>>, %arg5: memref<16x6xf32, #tpu.memory_space<vmem>>) attributes {dimension_semantics = [#tpu.dimension_semantics<parallel>], iteration_bounds = array<i64: 1>, scalar_prefetch = 0 : i64, scratch_operands = 0 : i64, tpu.core_type = #tpu.core_type<tc>, window_params = [{transform_indices = @transform_0, window_bounds = array<i64: 16, 128>}, {pipeline_mode = #tpu.pipeline_mode<synchronous>, transform_indices = @transform_1, window_bounds = array<i64: 128, 384>}, {pipeline_mode = #tpu.pipeline_mode<synchronous>, transform_indices = @transform_2, window_bounds = array<i64: 128, 6>}, {transform_indices = @transform_3, window_bounds = array<i64: 16, 384>}, {transform_indices = @transform_4, window_bounds = array<i64: 16, 6>}]} {
    %c0 = arith.constant 0 : index
    %c0_0 = arith.constant 0 : index
    %0 = vector.load %arg1[%c0, %c0_0] : memref<16x128xbf16, #tpu.memory_space<vmem>>, vector<16x128xbf16>
    %c0_1 = arith.constant 0 : index
    %c0_2 = arith.constant 0 : index
    %1 = vector.load %arg2[%c0_1, %c0_2] : memref<128x384xbf16, #tpu.memory_space<vmem>>, vector<128x384xbf16>
    %cst = arith.constant dense<0.000000e+00> : vector<16x384xf32>
    %2 = tpu.matmul %0, %1, %cst {dimension_numbers = #tpu.dot_dimension_numbers<[1], [0], [0], [1], [0, 0, 1, 1], [], []>} : vector<16x128xbf16>, vector<128x384xbf16>, vector<16x384xf32> -> vector<16x384xf32>
    %c0_3 = arith.constant 0 : index
    %c0_4 = arith.constant 0 : index
    %3 = vector.load %arg4[%c0_3, %c0_4] : memref<16x384xf32, #tpu.memory_space<vmem>>, vector<16x384xf32>
    tpu.vector_store %arg4[%c0_3, %c0_4], %2 {strides = array<i32>} : memref<16x384xf32, #tpu.memory_space<vmem>>, vector<16x384xf32>,
    %c0_5 = arith.constant 0 : index
    %c0_6 = arith.constant 0 : index
    %4 = vector.load %arg3[%c0_5, %c0_6] : memref<128x6xbf16, #tpu.memory_space<vmem>>, vector<128x6xbf16>
    %cst_7 = arith.constant dense<0.000000e+00> : vector<16x6xf32>
    %5 = tpu.matmul %0, %4, %cst_7 {dimension_numbers = #tpu.dot_dimension_numbers<[1], [0], [0], [1], [0, 0, 1, 1], [], []>} : vector<16x128xbf16>, vector<128x6xbf16>, vector<16x6xf32> -> vector<16x6xf32>
    %c0_8 = arith.constant 0 : index
    %c0_9 = arith.constant 0 : index
    %6 = vector.load %arg5[%c0_8, %c0_9] : memref<16x6xf32, #tpu.memory_space<vmem>>, vector<16x6xf32>
    tpu.vector_store %arg5[%c0_8, %c0_9], %5 {strides = array<i32>} : memref<16x6xf32, #tpu.memory_space<vmem>>, vector<16x6xf32>,
    return
  }
  func.func @transform_0(%arg0: i32) -> (i32, i32) {
    %c0_i32 = arith.constant 0 : i32
    %c0_i32_0 = arith.constant 0 : i32
    return %arg0, %c0_i32 : i32, i32
  }
  func.func @transform_1(%arg0: i32) -> (i32, i32) {
    %c0_i32 = arith.constant 0 : i32
    %c0_i32_0 = arith.constant 0 : i32
    %c0_i32_1 = arith.constant 0 : i32
    return %c0_i32, %c0_i32_0 : i32, i32
  }
  func.func @transform_2(%arg0: i32) -> (i32, i32) {
    %c0_i32 = arith.constant 0 : i32
    %c0_i32_0 = arith.constant 0 : i32
    %c0_i32_1 = arith.constant 0 : i32
    return %c0_i32, %c0_i32_0 : i32, i32
  }
  func.func @transform_3(%arg0: i32) -> (i32, i32) {
    %c0_i32 = arith.constant 0 : i32
    %c0_i32_0 = arith.constant 0 : i32
    return %arg0, %c0_i32 : i32, i32
  }
  func.func @transform_4(%arg0: i32) -> (i32, i32) {
    %c0_i32 = arith.constant 0 : i32
    %c0_i32_0 = arith.constant 0 : i32
    return %arg0, %c0_i32 : i32, i32
  }
}

module attributes {stable_mosaic.version = 11 : i64} {
  func.func @_segment_attention_kernel(%arg0: i32, %arg1: memref<32xi32, #tpu.memory_space<smem>>, %arg2: memref<32x1x128xf32, #tpu.memory_space<vmem>>, %arg3: memref<32x1x128xf32, #tpu.memory_space<vmem>>, %arg4: memref<1x1x128xf32, #tpu.memory_space<vmem>>, %arg5: memref<16x1x128xf32, #tpu.memory_space<vmem>>, %arg6: memref<32x1x128xf32, #tpu.memory_space<vmem>>) attributes {dimension_semantics = [#tpu.dimension_semantics<arbitrary>], iteration_bounds = array<i64: 1>, scalar_prefetch = 1 : i64, scratch_operands = 1 : i64, tpu.core_type = #tpu.core_type<tc>, window_params = [{transform_indices = @transform_0, window_bounds = array<i64: 32, 1, 128>}, {transform_indices = @transform_1, window_bounds = array<i64: 32, 1, 128>}, {pipeline_mode = #tpu.pipeline_mode<synchronous>, transform_indices = @transform_2, window_bounds = array<i64: 1, 1, 128>}, {pipeline_mode = #tpu.pipeline_mode<synchronous>, transform_indices = @transform_3, window_bounds = array<i64: 16, 1, 128>}]} {
    %c0_i32 = arith.constant 0 : i32
    %0 = arith.cmpi eq, %arg0, %c0_i32 : i32
    %1 = arith.extui %0 : i1 to i32
    %c0_i32_0 = arith.constant 0 : i32
    %2 = arith.cmpi ne, %1, %c0_i32_0 : i32
    scf.if %2 {
      %cst = arith.constant 0.000000e+00 : f32
      %12 = vector.broadcast %cst : f32 to vector<16x1x128xf32>
      %c0_14 = arith.constant 0 : index
      %c0_15 = arith.constant 0 : index
      %c0_16 = arith.constant 0 : index
      %13 = vector.load %arg5[%c0_14, %c0_15, %c0_16] : memref<16x1x128xf32, #tpu.memory_space<vmem>>, vector<16x1x128xf32>
      tpu.vector_store %arg5[%c0_14, %c0_15, %c0_16], %12 {strides = array<i32>} : memref<16x1x128xf32, #tpu.memory_space<vmem>>, vector<16x1x128xf32>,
    } else {
    }
    %c0 = arith.constant 0 : index
    %c0_1 = arith.constant 0 : index
    %c0_2 = arith.constant 0 : index
    %3 = vector.load %arg2[%c0, %c0_1, %c0_2] : memref<32x1x128xf32, #tpu.memory_space<vmem>>, vector<32x1x128xf32>
    %c0_3 = arith.constant 0 : index
    %c0_4 = arith.constant 0 : index
    %c0_5 = arith.constant 0 : index
    %4 = vector.load %arg3[%c0_3, %c0_4, %c0_5] : memref<32x1x128xf32, #tpu.memory_space<vmem>>, vector<32x1x128xf32>
    %5 = arith.mulf %3, %4 : vector<32x1x128xf32>
    %c0_6 = arith.constant 0 : index
    %c0_7 = arith.constant 0 : index
    %c0_8 = arith.constant 0 : index
    %6 = vector.load %arg6[%c0_6, %c0_7, %c0_8] : memref<32x1x128xf32, #tpu.memory_space<vmem>>, vector<32x1x128xf32>
    tpu.vector_store %arg6[%c0_6, %c0_7, %c0_8], %5 {strides = array<i32>} : memref<32x1x128xf32, #tpu.memory_space<vmem>>, vector<32x1x128xf32>,
    %c32_i32 = arith.constant 32 : i32
    %7 = arith.muli %arg0, %c32_i32 : i32
    %c0_i32_9 = arith.constant 0 : i32
    %c32_i32_10 = arith.constant 32 : i32
    %8 = arith.addi %c0_i32_9, %c32_i32_10 : i32
    %c1_i32 = arith.constant 1 : i32
    scf.for %arg7 = %c0_i32_9 to %8 step %c1_i32  : i32 {
      %12 = arith.addi %7, %arg7 : i32
      %13 = arith.index_cast %12 : i32 to index
      %14 = memref.load %arg1[%13] : memref<32xi32, #tpu.memory_space<smem>>
      %15 = arith.index_cast %14 : i32 to index
      %c0_14 = arith.constant 0 : index
      %c0_15 = arith.constant 0 : index
      %16 = vector.load %arg5[%15, %c0_14, %c0_15] : memref<16x1x128xf32, #tpu.memory_space<vmem>>, vector<1x1x128xf32>
      %17 = arith.index_cast %arg7 : i32 to index
      %c0_16 = arith.constant 0 : index
      %c0_17 = arith.constant 0 : index
      %18 = vector.load %arg6[%17, %c0_16, %c0_17] : memref<32x1x128xf32, #tpu.memory_space<vmem>>, vector<1x1x128xf32>
      %19 = arith.addf %16, %18 : vector<1x1x128xf32>
      %20 = arith.index_cast %14 : i32 to index
      %c0_18 = arith.constant 0 : index
      %c0_19 = arith.constant 0 : index
      %21 = vector.load %arg5[%20, %c0_18, %c0_19] : memref<16x1x128xf32, #tpu.memory_space<vmem>>, vector<1x1x128xf32>
      tpu.vector_store %arg5[%20, %c0_18, %c0_19], %19 {strides = array<i32>} : memref<16x1x128xf32, #tpu.memory_space<vmem>>, vector<1x1x128xf32>,
    }
    %c32_i32_11 = arith.constant 32 : i32
    %c0_i32_12 = arith.constant 0 : i32
    %9 = arith.cmpi eq, %arg0, %c0_i32_12 : i32
    %10 = arith.extui %9 : i1 to i32
    %c0_i32_13 = arith.constant 0 : i32
    %11 = arith.cmpi ne, %10, %c0_i32_13 : i32
    scf.if %11 {
      %c0_14 = arith.constant 0 : index
      %c0_15 = arith.constant 0 : index
      %c0_16 = arith.constant 0 : index
      %12 = vector.load %arg5[%c0_14, %c0_15, %c0_16] : memref<16x1x128xf32, #tpu.memory_space<vmem>>, vector<16x1x128xf32>
      %c0_17 = arith.constant 0 : index
      %c0_18 = arith.constant 0 : index
      %c0_19 = arith.constant 0 : index
      %13 = vector.load %arg4[%c0_17, %c0_18, %c0_19] : memref<1x1x128xf32, #tpu.memory_space<vmem>>, vector<1x1x128xf32>
      %14 = vector.broadcast %13 : vector<1x1x128xf32> to vector<16x1x128xf32>
      %15 = arith.addf %12, %14 : vector<16x1x128xf32>
      %c0_20 = arith.constant 0 : index
      %c0_21 = arith.constant 0 : index
      %c0_22 = arith.constant 0 : index
      %16 = vector.load %arg5[%c0_20, %c0_21, %c0_22] : memref<16x1x128xf32, #tpu.memory_space<vmem>>, vector<16x1x128xf32>
      tpu.vector_store %arg5[%c0_20, %c0_21, %c0_22], %15 {strides = array<i32>} : memref<16x1x128xf32, #tpu.memory_space<vmem>>, vector<16x1x128xf32>,
    } else {
    }
    return
  }
  func.func @transform_0(%arg0: i32, %arg1: memref<32xi32, #tpu.memory_space<smem>>) -> (i32, i32, i32) {
    %c0_i32 = arith.constant 0 : i32
    %c0_i32_0 = arith.constant 0 : i32
    %c0_i32_1 = arith.constant 0 : i32
    return %arg0, %c0_i32, %c0_i32_0 : i32, i32, i32
  }
  func.func @transform_1(%arg0: i32, %arg1: memref<32xi32, #tpu.memory_space<smem>>) -> (i32, i32, i32) {
    %c0_i32 = arith.constant 0 : i32
    %c0_i32_0 = arith.constant 0 : i32
    %c0_i32_1 = arith.constant 0 : i32
    return %arg0, %c0_i32, %c0_i32_0 : i32, i32, i32
  }
  func.func @transform_2(%arg0: i32, %arg1: memref<32xi32, #tpu.memory_space<smem>>) -> (i32, i32, i32) {
    %c0_i32 = arith.constant 0 : i32
    %c0_i32_0 = arith.constant 0 : i32
    %c0_i32_1 = arith.constant 0 : i32
    %c0_i32_2 = arith.constant 0 : i32
    return %c0_i32, %c0_i32_0, %c0_i32_1 : i32, i32, i32
  }
  func.func @transform_3(%arg0: i32, %arg1: memref<32xi32, #tpu.memory_space<smem>>) -> (i32, i32, i32) {
    %c0_i32 = arith.constant 0 : i32
    %c0_i32_0 = arith.constant 0 : i32
    %c0_i32_1 = arith.constant 0 : i32
    %c0_i32_2 = arith.constant 0 : i32
    return %c0_i32, %c0_i32_0, %c0_i32_1 : i32, i32, i32
  }
}

</mosaic_0001>

<llo_original>
// kernel: _lambda_.4
$region0: #{_lambda_.4}
  #allocation0 [shape = 'u32[]', space=smem, size = 0x4, offset = 0x4, fixed_abs, tag = 'smem constant byte address 0x4 - core index']
  #allocation1 [shape = 'u32[72,128]{1,0:T(1,128)}', space=vmem, size = 0x9000, scoped, tag = 'internal scratch']
  %s0 = inlined_call_operand.vmem [shape: bf16[16,384], index: 0, kind: input, shape index: {}]
  %s1 = inlined_call_operand.hbm [shape: bf16[384,384], index: 1, kind: input, shape index: {}]
  %s2 = inlined_call_operand.hbm [shape: bf16[384,24], index: 2, kind: input, shape index: {}]
  %s3 = inlined_call_operand.vmem [shape: f32[16,384], index: 3, kind: output, shape index: {0}]
  %s4 = inlined_call_operand.vmem [shape: f32[16,24], index: 4, kind: output, shape index: {1}]
  %5 = xla_tuple %s3, %s4
  %s6 = sld [smem:[#allocation0]]
  $region38: #{_lambda_.4} parent=0
    _
  %s8 = ssub.s32 1, %s6
  %s9 = scalar_select 0, %s8, %s6
  $region1: #{_lambda_.4} parent=0
    #allocation2 [shape = 'u8[294912]{0}', space=vmem, size = 0x48000, scoped, tag = 'input window, operand 1, single buffered']
    #allocation3 [shape = 's32[1]{0}', space=sflag, size = 0x4, scoped, tag = 'scoped memory for _lambda_.4']
    #allocation4 [shape = 'u8[98304]{0}', space=vmem, size = 0x18000, scoped, tag = 'input window, operand 2, single buffered']
    #allocation5 [shape = 's32[1]{0}', space=sflag, size = 0x4, scoped, tag = 'scoped memory for _lambda_.4']
    %10 = vsyncpa [#allocation3], 0
    %11 = vsyncpa [#allocation5], 0
    // Predicated region
    $region2: #{_lambda_.4} parent=1 // pred_check
      _
    $region3: #{_lambda_.4} parent=1 // pred_check_branch
      %13 = sbr.rel (0) target = $region5
    $region4: #{_lambda_.4} parent=1 // pred_region
      _
    $region5: #{_lambda_.4} parent=1 // pred_fallthru
      _
    // Predicated region
    $region6: #{_lambda_.4} parent=1 // pred_check
      _
    $region7: #{_lambda_.4} parent=1 // pred_check_branch
      %15 = sbr.rel (0) target = $region9
    $region8: #{_lambda_.4} parent=1 // pred_region
      %17 = vsyncadd [#allocation3], 0
      %s18 = sshll.u32 %s1, 4
      %s19 = int_to_ptr.hbm [resolvable:$true] %s18
      %s20 = sshll.u32 [#allocation2], 4
      %s21 = int_to_ptr.vmem [resolvable:$true] %s20
      %26 = dma.hbm_to_vmem [thread:$0]  %s19, 9216, %s21, [#allocation3], 192, 192, 12
    $region9: #{_lambda_.4} parent=1 // pred_fallthru
      _
    // Predicated region
    $region10: #{_lambda_.4} parent=1 // pred_check
      _
    $region11: #{_lambda_.4} parent=1 // pred_check_branch
      %28 = sbr.rel (0) target = $region13
    $region12: #{_lambda_.4} parent=1 // pred_region
      %30 = vsyncadd [#allocation5], 0
      %s31 = sshll.u32 %s2, 4
      %s32 = int_to_ptr.hbm [resolvable:$true] %s31
      %s33 = sshll.u32 [#allocation4], 4
      %s34 = int_to_ptr.vmem [resolvable:$true] %s33
      %39 = dma.hbm_to_vmem [thread:$0]  %s32, 3072, %s34, [#allocation5], 64, 64, 4
    $region13: #{_lambda_.4} parent=1 // pred_fallthru
      _
    // Predicated region
    $region14: #{_lambda_.4} parent=1 // pred_check
      _
    $region15: #{_lambda_.4} parent=1 // pred_check_branch
      %41 = sbr.rel (0) target = $region17
    $region16: #{_lambda_.4} parent=1 // pred_region
      %43 = dma.done [#allocation3], 9216
    $region17: #{_lambda_.4} parent=1 // pred_fallthru
      _
    // Predicated region
    $region18: #{_lambda_.4} parent=1 // pred_check
      _
    $region19: #{_lambda_.4} parent=1 // pred_check_branch
      %45 = sbr.rel (0) target = $region21
    $region20: #{_lambda_.4} parent=1 // pred_region
      %47 = dma.done [#allocation5], 3072
    $region21: #{_lambda_.4} parent=1 // pred_fallthru
      _
    %v48 = vld [vmem:[%s0] sm:$0xff]
    %v49 = vld [vmem:[%s0 + $0x8] sm:$0xf]
    %v50 = vld [vmem:[%s0 + $0xc] sm:$0xff]
    %v51 = vld [vmem:[%s0 + $0x14] sm:$0xf]
    %v52 = vld [vmem:[#allocation2] sm:$0xff]
    %v53 = vld [vmem:[#allocation2 + $0x8] sm:$0xf]
    %v54 = vld [vmem:[#allocation2 + $0xc] sm:$0xff]
    %v55 = vld [vmem:[#allocation2 + $0x14] sm:$0xf]
    %v56 = vld [vmem:[#allocation2 + $0x18] sm:$0xff]
    %v57 = vld [vmem:[#allocation2 + $0x20] sm:$0xf]
    %v58 = vld [vmem:[#allocation2 + $0x24] sm:$0xff]
    %v59 = vld [vmem:[#allocation2 + $0x2c] sm:$0xf]
    %v60 = vld [vmem:[#allocation2 + $0x30] sm:$0xff]
    %v61 = vld [vmem:[#allocation2 + $0x38] sm:$0xf]
    %v62 = vld [vmem:[#allocation2 + $0x3c] sm:$0xff]
    %v63 = vld [vmem:[#allocation2 + $0x44] sm:$0xf]
    %v64 = vld [vmem:[#allocation2 + $0x48] sm:$0xff]
    %v65 = vld [vmem:[#allocation2 + $0x50] sm:$0xf]
    %v66 = vld [vmem:[#allocation2 + $0x54] sm:$0xff]
    %v67 = vld [vmem:[#allocation2 + $0x5c] sm:$0xf]
    %v68 = vld [vmem:[#allocation2 + $0x60] sm:$0xff]
    %v69 = vld [vmem:[#allocation2 + $0x68] sm:$0xf]
    %v70 = vld [vmem:[#allocation2 + $0x6c] sm:$0xff]
    %v71 = vld [vmem:[#allocation2 + $0x74] sm:$0xf]
    %v72 = vld [vmem:[#allocation2 + $0x78] sm:$0xff]
    %v73 = vld [vmem:[#allocation2 + $0x80] sm:$0xf]
    %v74 = vld [vmem:[#allocation2 + $0x84] sm:$0xff]
    %v75 = vld [vmem:[#allocation2 + $0x8c] sm:$0xf]
    %v76 = vld [vmem:[#allocation2 + $0x90] sm:$0xff]
    %v77 = vld [vmem:[#allocation2 + $0x98] sm:$0xf]
    %v78 = vld [vmem:[#allocation2 + $0x9c] sm:$0xff]
    %v79 = vld [vmem:[#allocation2 + $0xa4] sm:$0xf]
    %v80 = vld [vmem:[#allocation2 + $0xa8] sm:$0xff]
    %v81 = vld [vmem:[#allocation2 + $0xb0] sm:$0xf]
    %v82 = vld [vmem:[#allocation2 + $0xb4] sm:$0xff]
    %v83 = vld [vmem:[#allocation2 + $0xbc] sm:$0xf]
    %v84 = vld [vmem:[#allocation2 + $0xc0] sm:$0xff]
    %v85 = vld [vmem:[#allocation2 + $0xc8] sm:$0xf]
    %v86 = vld [vmem:[#allocation2 + $0xcc] sm:$0xff]
    %v87 = vld [vmem:[#allocation2 + $0xd4] sm:$0xf]
    %v88 = vld [vmem:[#allocation2 + $0xd8] sm:$0xff]
    %v89 = vld [vmem:[#allocation2 + $0xe0] sm:$0xf]
    %v90 = vld [vmem:[#allocation2 + $0xe4] sm:$0xff]
    %v91 = vld [vmem:[#allocation2 + $0xec] sm:$0xf]
    %v92 = vld [vmem:[#allocation2 + $0xf0] sm:$0xff]
    %v93 = vld [vmem:[#allocation2 + $0xf8] sm:$0xf]
    %v94 = vld [vmem:[#allocation2 + $0xfc] sm:$0xff]
    %v95 = vld [vmem:[#allocation2 + $0x104] sm:$0xf]
    %v96 = vld [vmem:[#allocation2 + $0x108] sm:$0xff]
    %v97 = vld [vmem:[#allocation2 + $0x110] sm:$0xf]
    %v98 = vld [vmem:[#allocation2 + $0x114] sm:$0xff]
    %v99 = vld [vmem:[#allocation2 + $0x11c] sm:$0xf]
    %v100 = vld [vmem:[#allocation2 + $0x120] sm:$0xff]
    %v101 = vld [vmem:[#allocation2 + $0x128] sm:$0xf]
    %v102 = vld [vmem:[#allocation2 + $0x12c] sm:$0xff]
    %v103 = vld [vmem:[#allocation2 + $0x134] sm:$0xf]
    %v104 = vld [vmem:[#allocation2 + $0x138] sm:$0xff]
    %v105 = vld [vmem:[#allocation2 + $0x140] sm:$0xf]
    %v106 = vld [vmem:[#allocation2 + $0x144] sm:$0xff]
    %v107 = vld [vmem:[#allocation2 + $0x14c] sm:$0xf]
    %v108 = vld [vmem:[#allocation2 + $0x150] sm:$0xff]
    %v109 = vld [vmem:[#allocation2 + $0x158] sm:$0xf]
    %v110 = vld [vmem:[#allocation2 + $0x15c] sm:$0xff]
    %v111 = vld [vmem:[#allocation2 + $0x164] sm:$0xf]
    %v112 = vld [vmem:[#allocation2 + $0x168] sm:$0xff]
    %v113 = vld [vmem:[#allocation2 + $0x170] sm:$0xf]
    %v114 = vld [vmem:[#allocation2 + $0x174] sm:$0xff]
    %v115 = vld [vmem:[#allocation2 + $0x17c] sm:$0xf]
    %v116 = vld [vmem:[#allocation2 + $0x180] sm:$0xff]
    %v117 = vld [vmem:[#allocation2 + $0x188] sm:$0xf]
    %v118 = vld [vmem:[#allocation2 + $0x18c] sm:$0xff]
    %v119 = vld [vmem:[#allocation2 + $0x194] sm:$0xf]
    %v120 = vld [vmem:[#allocation2 + $0x198] sm:$0xff]
    %v121 = vld [vmem:[#allocation2 + $0x1a0] sm:$0xf]
    %v122 = vld [vmem:[#allocation2 + $0x1a4] sm:$0xff]
    %v123 = vld [vmem:[#allocation2 + $0x1ac] sm:$0xf]
    %v124 = vld [vmem:[#allocation2 + $0x1b0] sm:$0xff]
    %v125 = vld [vmem:[#allocation2 + $0x1b8] sm:$0xf]
    %v126 = vld [vmem:[#allocation2 + $0x1bc] sm:$0xff]
    %v127 = vld [vmem:[#allocation2 + $0x1c4] sm:$0xf]
    %v128 = vld [vmem:[#allocation2 + $0x1c8] sm:$0xff]
    %v129 = vld [vmem:[#allocation2 + $0x1d0] sm:$0xf]
    %v130 = vld [vmem:[#allocation2 + $0x1d4] sm:$0xff]
    %v131 = vld [vmem:[#allocation2 + $0x1dc] sm:$0xf]
    %v132 = vld [vmem:[#allocation2 + $0x1e0] sm:$0xff]
    %v133 = vld [vmem:[#allocation2 + $0x1e8] sm:$0xf]
    %v134 = vld [vmem:[#allocation2 + $0x1ec] sm:$0xff]
    %v135 = vld [vmem:[#allocation2 + $0x1f4] sm:$0xf]
    %v136 = vld [vmem:[#allocation2 + $0x1f8] sm:$0xff]
    %v137 = vld [vmem:[#allocation2 + $0x200] sm:$0xf]
    %v138 = vld [vmem:[#allocation2 + $0x204] sm:$0xff]
    %v139 = vld [vmem:[#allocation2 + $0x20c] sm:$0xf]
    %v140 = vld [vmem:[#allocation2 + $0x210] sm:$0xff]
    %v141 = vld [vmem:[#allocation2 + $0x218] sm:$0xf]
    %v142 = vld [vmem:[#allocation2 + $0x21c] sm:$0xff]
    %v143 = vld [vmem:[#allocation2 + $0x224] sm:$0xf]
    %v144 = vld [vmem:[#allocation2 + $0x228] sm:$0xff]
    %v145 = vld [vmem:[#allocation2 + $0x230] sm:$0xf]
    %v146 = vld [vmem:[#allocation2 + $0x234] sm:$0xff]
    %v147 = vld [vmem:[#allocation2 + $0x23c] sm:$0xf]
    %v152 = vunpack.c.l.b16 %v48
    %v153 = vunpack.c.h.b16 %v48
    %v154 = vunpack.c.l.b16 %v49
    %v155 = vunpack.c.l.b16 %v50
    %v156 = vunpack.c.h.b16 %v50
    %v157 = vunpack.c.l.b16 %v51
    %v158 = vpack.c.b16 %v155, %v152
    %v159 = vpack.c.b16 %v156, %v153
    %v160 = vpack.c.b16 %v157, %v154
    %v260 = vunpack.c.l.b16 %v52
    %v261 = vunpack.c.h.b16 %v52
    %v262 = vunpack.c.l.b16 %v53
    %v263 = vunpack.c.l.b16 %v54
    %v264 = vunpack.c.h.b16 %v54
    %v265 = vunpack.c.l.b16 %v55
    %v266 = vunpack.c.l.b16 %v56
    %v267 = vunpack.c.h.b16 %v56
    %v268 = vunpack.c.l.b16 %v57
    %v269 = vunpack.c.l.b16 %v58
    %v270 = vunpack.c.h.b16 %v58
    %v271 = vunpack.c.l.b16 %v59
    %v272 = vunpack.c.l.b16 %v60
    %v273 = vunpack.c.h.b16 %v60
    %v274 = vunpack.c.l.b16 %v61
    %v275 = vunpack.c.l.b16 %v62
    %v276 = vunpack.c.h.b16 %v62
    %v277 = vunpack.c.l.b16 %v63
    %v278 = vunpack.c.l.b16 %v64
    %v279 = vunpack.c.h.b16 %v64
    %v280 = vunpack.c.l.b16 %v65
    %v281 = vunpack.c.l.b16 %v66
    %v282 = vunpack.c.h.b16 %v66
    %v283 = vunpack.c.l.b16 %v67
    %v284 = vunpack.c.l.b16 %v68
    %v285 = vunpack.c.h.b16 %v68
    %v286 = vunpack.c.l.b16 %v69
    %v287 = vunpack.c.l.b16 %v70
    %v288 = vunpack.c.h.b16 %v70
    %v289 = vunpack.c.l.b16 %v71
    %v290 = vunpack.c.l.b16 %v72
    %v291 = vunpack.c.h.b16 %v72
    %v292 = vunpack.c.l.b16 %v73
    %v293 = vunpack.c.l.b16 %v74
    %v294 = vunpack.c.h.b16 %v74
    %v295 = vunpack.c.l.b16 %v75
    %v296 = vunpack.c.l.b16 %v76
    %v297 = vunpack.c.h.b16 %v76
    %v298 = vunpack.c.l.b16 %v77
    %v299 = vunpack.c.l.b16 %v78
    %v300 = vunpack.c.h.b16 %v78
    %v301 = vunpack.c.l.b16 %v79
    %v302 = vunpack.c.l.b16 %v80
    %v303 = vunpack.c.h.b16 %v80
    %v304 = vunpack.c.l.b16 %v81
    %v305 = vunpack.c.l.b16 %v82
    %v306 = vunpack.c.h.b16 %v82
    %v307 = vunpack.c.l.b16 %v83
    %v308 = vunpack.c.l.b16 %v84
    %v309 = vunpack.c.h.b16 %v84
    %v310 = vunpack.c.l.b16 %v85
    %v311 = vunpack.c.l.b16 %v86
    %v312 = vunpack.c.h.b16 %v86
    %v313 = vunpack.c.l.b16 %v87
    %v314 = vunpack.c.l.b16 %v88
    %v315 = vunpack.c.h.b16 %v88
    %v316 = vunpack.c.l.b16 %v89
    %v317 = vunpack.c.l.b16 %v90
    %v318 = vunpack.c.h.b16 %v90
    %v319 = vunpack.c.l.b16 %v91
    %v320 = vunpack.c.l.b16 %v92
    %v321 = vunpack.c.h.b16 %v92
    %v322 = vunpack.c.l.b16 %v93
    %v323 = vunpack.c.l.b16 %v94
    %v324 = vunpack.c.h.b16 %v94
    %v325 = vunpack.c.l.b16 %v95
    %v326 = vunpack.c.l.b16 %v96
    %v327 = vunpack.c.h.b16 %v96
    %v328 = vunpack.c.l.b16 %v97
    %v329 = vunpack.c.l.b16 %v98
    %v330 = vunpack.c.h.b16 %v98
    %v331 = vunpack.c.l.b16 %v99
    %v332 = vunpack.c.l.b16 %v100
    %v333 = vunpack.c.h.b16 %v100
    %v334 = vunpack.c.l.b16 %v101
    %v335 = vunpack.c.l.b16 %v102
    %v336 = vunpack.c.h.b16 %v102
    %v337 = vunpack.c.l.b16 %v103
    %v338 = vunpack.c.l.b16 %v104
    %v339 = vunpack.c.h.b16 %v104
    %v340 = vunpack.c.l.b16 %v105
    %v341 = vunpack.c.l.b16 %v106
    %v342 = vunpack.c.h.b16 %v106
    %v343 = vunpack.c.l.b16 %v107
    %v344 = vunpack.c.l.b16 %v108
    %v345 = vunpack.c.h.b16 %v108
    %v346 = vunpack.c.l.b16 %v109
    %v347 = vunpack.c.l.b16 %v110
    %v348 = vunpack.c.h.b16 %v110
    %v349 = vunpack.c.l.b16 %v111
    %v350 = vunpack.c.l.b16 %v112
    %v351 = vunpack.c.h.b16 %v112
    %v352 = vunpack.c.l.b16 %v113
    %v353 = vunpack.c.l.b16 %v114
    %v354 = vunpack.c.h.b16 %v114
    %v355 = vunpack.c.l.b16 %v115
    %v356 = vunpack.c.l.b16 %v116
    %v357 = vunpack.c.h.b16 %v116
    %v358 = vunpack.c.l.b16 %v117
    %v359 = vunpack.c.l.b16 %v118
    %v360 = vunpack.c.h.b16 %v118
    %v361 = vunpack.c.l.b16 %v119
    %v362 = vunpack.c.l.b16 %v120
    %v363 = vunpack.c.h.b16 %v120
    %v364 = vunpack.c.l.b16 %v121
    %v365 = vunpack.c.l.b16 %v122
    %v366 = vunpack.c.h.b16 %v122
    %v367 = vunpack.c.l.b16 %v123
    %v368 = vunpack.c.l.b16 %v124
    %v369 = vunpack.c.h.b16 %v124
    %v370 = vunpack.c.l.b16 %v125
    %v371 = vunpack.c.l.b16 %v126
    %v372 = vunpack.c.h.b16 %v126
    %v373 = vunpack.c.l.b16 %v127
    %v374 = vunpack.c.l.b16 %v128
    %v375 = vunpack.c.h.b16 %v128
    %v376 = vunpack.c.l.b16 %v129
    %v377 = vunpack.c.l.b16 %v130
    %v378 = vunpack.c.h.b16 %v130
    %v379 = vunpack.c.l.b16 %v131
    %v380 = vunpack.c.l.b16 %v132
    %v381 = vunpack.c.h.b16 %v132
    %v382 = vunpack.c.l.b16 %v133
    %v383 = vunpack.c.l.b16 %v134
    %v384 = vunpack.c.h.b16 %v134
    %v385 = vunpack.c.l.b16 %v135
    %v386 = vunpack.c.l.b16 %v136
    %v387 = vunpack.c.h.b16 %v136
    %v388 = vunpack.c.l.b16 %v137
    %v389 = vunpack.c.l.b16 %v138
    %v390 = vunpack.c.h.b16 %v138
    %v391 = vunpack.c.l.b16 %v139
    %v392 = vunpack.c.l.b16 %v140
    %v393 = vunpack.c.h.b16 %v140
    %v394 = vunpack.c.l.b16 %v141
    %v395 = vunpack.c.l.b16 %v142
    %v396 = vunpack.c.h.b16 %v142
    %v397 = vunpack.c.l.b16 %v143
    %v398 = vunpack.c.l.b16 %v144
    %v399 = vunpack.c.h.b16 %v144
    %v400 = vunpack.c.l.b16 %v145
    %v401 = vunpack.c.l.b16 %v146
    %v402 = vunpack.c.h.b16 %v146
    %v403 = vunpack.c.l.b16 %v147
    %v404 = vpack.c.b16 %v263, %v260
    %v405 = vpack.c.b16 %v264, %v261
    %v406 = vpack.c.b16 %v265, %v262
    %v407 = vpack.c.b16 %v269, %v266
    %v408 = vpack.c.b16 %v270, %v267
    %v409 = vpack.c.b16 %v271, %v268
    %v410 = vpack.c.b16 %v275, %v272
    %v411 = vpack.c.b16 %v276, %v273
    %v412 = vpack.c.b16 %v277, %v274
    %v413 = vpack.c.b16 %v281, %v278
    %v414 = vpack.c.b16 %v282, %v279
    %v415 = vpack.c.b16 %v283, %v280
    %v416 = vpack.c.b16 %v287, %v284
    %v417 = vpack.c.b16 %v288, %v285
    %v418 = vpack.c.b16 %v289, %v286
    %v419 = vpack.c.b16 %v293, %v290
    %v420 = vpack.c.b16 %v294, %v291
    %v421 = vpack.c.b16 %v295, %v292
    %v422 = vpack.c.b16 %v299, %v296
    %v423 = vpack.c.b16 %v300, %v297
    %v424 = vpack.c.b16 %v301, %v298
    %v425 = vpack.c.b16 %v305, %v302
    %v426 = vpack.c.b16 %v306, %v303
    %v427 = vpack.c.b16 %v307, %v304
    %v428 = vpack.c.b16 %v311, %v308
    %v429 = vpack.c.b16 %v312, %v309
    %v430 = vpack.c.b16 %v313, %v310
    %v431 = vpack.c.b16 %v317, %v314
    %v432 = vpack.c.b16 %v318, %v315
    %v433 = vpack.c.b16 %v319, %v316
    %v434 = vpack.c.b16 %v323, %v320
    %v435 = vpack.c.b16 %v324, %v321
    %v436 = vpack.c.b16 %v325, %v322
    %v437 = vpack.c.b16 %v329, %v326
    %v438 = vpack.c.b16 %v330, %v327
    %v439 = vpack.c.b16 %v331, %v328
    %v440 = vpack.c.b16 %v335, %v332
    %v441 = vpack.c.b16 %v336, %v333
    %v442 = vpack.c.b16 %v337, %v334
    %v443 = vpack.c.b16 %v341, %v338
    %v444 = vpack.c.b16 %v342, %v339
    %v445 = vpack.c.b16 %v343, %v340
    %v446 = vpack.c.b16 %v347, %v344
    %v447 = vpack.c.b16 %v348, %v345
    %v448 = vpack.c.b16 %v349, %v346
    %v449 = vpack.c.b16 %v353, %v350
    %v450 = vpack.c.b16 %v354, %v351
    %v451 = vpack.c.b16 %v355, %v352
    %v452 = vpack.c.b16 %v359, %v356
    %v453 = vpack.c.b16 %v360, %v357
    %v454 = vpack.c.b16 %v361, %v358
    %v455 = vpack.c.b16 %v365, %v362
    %v456 = vpack.c.b16 %v366, %v363
    %v457 = vpack.c.b16 %v367, %v364
    %v458 = vpack.c.b16 %v371, %v368
    %v459 = vpack.c.b16 %v372, %v369
    %v460 = vpack.c.b16 %v373, %v370
    %v461 = vpack.c.b16 %v377, %v374
    %v462 = vpack.c.b16 %v378, %v375
    %v463 = vpack.c.b16 %v379, %v376
    %v464 = vpack.c.b16 %v383, %v380
    %v465 = vpack.c.b16 %v384, %v381
    %v466 = vpack.c.b16 %v385, %v382
    %v467 = vpack.c.b16 %v389, %v386
    %v468 = vpack.c.b16 %v390, %v387
    %v469 = vpack.c.b16 %v391, %v388
    %v470 = vpack.c.b16 %v395, %v392
    %v471 = vpack.c.b16 %v396, %v393
    %v472 = vpack.c.b16 %v397, %v394
    %v473 = vpack.c.b16 %v401, %v398
    %v474 = vpack.c.b16 %v402, %v399
    %v475 = vpack.c.b16 %v403, %v400
    %548 = vmatpush.bf16.msra.mxu0 %v425
    %549 = vmatpush.bf16.msra.mxu0 %v422
    %550 = vmatpush.bf16.msra.mxu0 %v419
    %551 = vmatpush.bf16.msra.mxu0 %v416
    %552 = vmatpush.bf16.msra.mxu0 %v413
    %553 = vmatpush.bf16.msra.mxu0 %v410
    %554 = vmatpush.bf16.msra.mxu0 %v407
    %555 = vmatpush.bf16.msra.mxu0 %v404
    %556 = vmatmul.bf16.gmra.mxu0 %v158
    %v557 = vpop.f32.mrf.mxu0
    %v558 = vadd.f32 0.0, %v557
    %v559 = vpop.f32.mrf.mxu0
    %v560 = vadd.f32 0.0, %v559
    %561 = vdwg.mxu0
    %562 = vmatpush.bf16.msra.mxu0 %v449
    %563 = vmatpush.bf16.msra.mxu0 %v446
    %564 = vmatpush.bf16.msra.mxu0 %v443
    %565 = vmatpush.bf16.msra.mxu0 %v440
    %566 = vmatpush.bf16.msra.mxu0 %v437
    %567 = vmatpush.bf16.msra.mxu0 %v434
    %568 = vmatpush.bf16.msra.mxu0 %v431
    %569 = vmatpush.bf16.msra.mxu0 %v428
    %570 = vmatmul.bf16.gmra.mxu0 %v159
    %v571 = vpop.f32.mrf.mxu0
    %v572 = vadd.f32 %v558, %v571
    %v573 = vpop.f32.mrf.mxu0
    %v574 = vadd.f32 %v560, %v573
    %575 = vdwg.mxu0
    %576 = vmatpush.bf16.msra.mxu0 %v473
    %577 = vmatpush.bf16.msra.mxu0 %v470
    %578 = vmatpush.bf16.msra.mxu0 %v467
    %579 = vmatpush.bf16.msra.mxu0 %v464
    %580 = vmatpush.bf16.msra.mxu0 %v461
    %581 = vmatpush.bf16.msra.mxu0 %v458
    %582 = vmatpush.bf16.msra.mxu0 %v455
    %583 = vmatpush.bf16.msra.mxu0 %v452
    %584 = vmatmul.bf16.gmra.mxu0 %v160
    %v585 = vpop.f32.mrf.mxu0
    %v586 = vadd.f32 %v572, %v585
    %v587 = vpop.f32.mrf.mxu0
    %v588 = vadd.f32 %v574, %v587
    %589 = vdwg.mxu0
    %590 = vmatpush.bf16.msra.mxu0 %v426
    %591 = vmatpush.bf16.msra.mxu0 %v423
    %592 = vmatpush.bf16.msra.mxu0 %v420
    %593 = vmatpush.bf16.msra.mxu0 %v417
    %594 = vmatpush.bf16.msra.mxu0 %v414
    %595 = vmatpush.bf16.msra.mxu0 %v411
    %596 = vmatpush.bf16.msra.mxu0 %v408
    %597 = vmatpush.bf16.msra.mxu0 %v405
    %598 = vmatmul.bf16.gmra.mxu0 %v158
    %v599 = vpop.f32.mrf.mxu0
    %v600 = vadd.f32 0.0, %v599
    %v601 = vpop.f32.mrf.mxu0
    %v602 = vadd.f32 0.0, %v601
    %603 = vdwg.mxu0
    %604 = vmatpush.bf16.msra.mxu0 %v450
    %605 = vmatpush.bf16.msra.mxu0 %v447
    %606 = vmatpush.bf16.msra.mxu0 %v444
    %607 = vmatpush.bf16.msra.mxu0 %v441
    %608 = vmatpush.bf16.msra.mxu0 %v438
    %609 = vmatpush.bf16.msra.mxu0 %v435
    %610 = vmatpush.bf16.msra.mxu0 %v432
    %611 = vmatpush.bf16.msra.mxu0 %v429
    %612 = vmatmul.bf16.gmra.mxu0 %v159
    %v613 = vpop.f32.mrf.mxu0
    %v614 = vadd.f32 %v600, %v613
    %v615 = vpop.f32.mrf.mxu0
    %v616 = vadd.f32 %v602, %v615
    %617 = vdwg.mxu0
    %618 = vmatpush.bf16.msra.mxu0 %v474
    %619 = vmatpush.bf16.msra.mxu0 %v471
    %620 = vmatpush.bf16.msra.mxu0 %v468
    %621 = vmatpush.bf16.msra.mxu0 %v465
    %622 = vmatpush.bf16.msra.mxu0 %v462
    %623 = vmatpush.bf16.msra.mxu0 %v459
    %624 = vmatpush.bf16.msra.mxu0 %v456
    %625 = vmatpush.bf16.msra.mxu0 %v453
    %626 = vmatmul.bf16.gmra.mxu0 %v160
    %v627 = vpop.f32.mrf.mxu0
    %v628 = vadd.f32 %v614, %v627
    %v629 = vpop.f32.mrf.mxu0
    %v630 = vadd.f32 %v616, %v629
    %631 = vdwg.mxu0
    %632 = vmatpush.bf16.msra.mxu0 %v427
    %633 = vmatpush.bf16.msra.mxu0 %v424
    %634 = vmatpush.bf16.msra.mxu0 %v421
    %635 = vmatpush.bf16.msra.mxu0 %v418
    %636 = vmatpush.bf16.msra.mxu0 %v415
    %637 = vmatpush.bf16.msra.mxu0 %v412
    %638 = vmatpush.bf16.msra.mxu0 %v409
    %639 = vmatpush.bf16.msra.mxu0 %v406
    %640 = vmatmul.bf16.gmra.mxu0 %v158
    %v641 = vpop.f32.mrf.mxu0
    %v642 = vadd.f32 0.0, %v641
    %v643 = vpop.f32.mrf.mxu0
    %v644 = vadd.f32 0.0, %v643
    %645 = vdwg.mxu0
    %646 = vmatpush.bf16.msra.mxu0 %v451
    %647 = vmatpush.bf16.msra.mxu0 %v448
    %648 = vmatpush.bf16.msra.mxu0 %v445
    %649 = vmatpush.bf16.msra.mxu0 %v442
    %650 = vmatpush.bf16.msra.mxu0 %v439
    %651 = vmatpush.bf16.msra.mxu0 %v436
    %652 = vmatpush.bf16.msra.mxu0 %v433
    %653 = vmatpush.bf16.msra.mxu0 %v430
    %654 = vmatmul.bf16.gmra.mxu0 %v159
    %v655 = vpop.f32.mrf.mxu0
    %v656 = vadd.f32 %v642, %v655
    %v657 = vpop.f32.mrf.mxu0
    %v658 = vadd.f32 %v644, %v657
    %659 = vdwg.mxu0
    %660 = vmatpush.bf16.msra.mxu0 %v475
    %661 = vmatpush.bf16.msra.mxu0 %v472
    %662 = vmatpush.bf16.msra.mxu0 %v469
    %663 = vmatpush.bf16.msra.mxu0 %v466
    %664 = vmatpush.bf16.msra.mxu0 %v463
    %665 = vmatpush.bf16.msra.mxu0 %v460
    %666 = vmatpush.bf16.msra.mxu0 %v457
    %667 = vmatpush.bf16.msra.mxu0 %v454
    %668 = vmatmul.bf16.gmra.mxu0 %v160
    %v669 = vpop.f32.mrf.mxu0
    %v670 = vadd.f32 %v656, %v669
    %v671 = vpop.f32.mrf.mxu0
    %v672 = vadd.f32 %v658, %v671
    %673 = vdwg.mxu0
    %674 = vst [vmem:[%s3] sm:$0xff] %v586
    %675 = vst [vmem:[%s3 + $0x8] sm:$0xff] %v628
    %676 = vst [vmem:[%s3 + $0x10] sm:$0xff] %v670
    %677 = vst [vmem:[%s3 + $0x18] sm:$0xff] %v588
    %678 = vst [vmem:[%s3 + $0x20] sm:$0xff] %v630
    %679 = vst [vmem:[%s3 + $0x28] sm:$0xff] %v672
    %v680 = vld [vmem:[#allocation4] sm:$0xf]
    %v681 = vld [vmem:[#allocation4 + $0x4] sm:$0xf]
    %v682 = vld [vmem:[#allocation4 + $0x8] sm:$0xf]
    %v683 = vld [vmem:[#allocation4 + $0xc] sm:$0xf]
    %v684 = vld [vmem:[#allocation4 + $0x10] sm:$0xf]
    %v685 = vld [vmem:[#allocation4 + $0x14] sm:$0xf]
    %v686 = vld [vmem:[#allocation4 + $0x18] sm:$0xf]
    %v687 = vld [vmem:[#allocation4 + $0x1c] sm:$0xf]
    %v688 = vld [vmem:[#allocation4 + $0x20] sm:$0xf]
    %v689 = vld [vmem:[#allocation4 + $0x24] sm:$0xf]
    %v690 = vld [vmem:[#allocation4 + $0x28] sm:$0xf]
    %v691 = vld [vmem:[#allocation4 + $0x2c] sm:$0xf]
    %v692 = vld [vmem:[#allocation4 + $0x30] sm:$0xf]
    %v693 = vld [vmem:[#allocation4 + $0x34] sm:$0xf]
    %v694 = vld [vmem:[#allocation4 + $0x38] sm:$0xf]
    %v695 = vld [vmem:[#allocation4 + $0x3c] sm:$0xf]
    %v696 = vld [vmem:[#allocation4 + $0x40] sm:$0xf]
    %v697 = vld [vmem:[#allocation4 + $0x44] sm:$0xf]
    %v698 = vld [vmem:[#allocation4 + $0x48] sm:$0xf]
    %v699 = vld [vmem:[#allocation4 + $0x4c] sm:$0xf]
    %v700 = vld [vmem:[#allocation4 + $0x50] sm:$0xf]
    %v701 = vld [vmem:[#allocation4 + $0x54] sm:$0xf]
    %v702 = vld [vmem:[#allocation4 + $0x58] sm:$0xf]
    %v703 = vld [vmem:[#allocation4 + $0x5c] sm:$0xf]
    %v704 = vld [vmem:[#allocation4 + $0x60] sm:$0xf]
    %v705 = vld [vmem:[#allocation4 + $0x64] sm:$0xf]
    %v706 = vld [vmem:[#allocation4 + $0x68] sm:$0xf]
    %v707 = vld [vmem:[#allocation4 + $0x6c] sm:$0xf]
    %v708 = vld [vmem:[#allocation4 + $0x70] sm:$0xf]
    %v709 = vld [vmem:[#allocation4 + $0x74] sm:$0xf]
    %v710 = vld [vmem:[#allocation4 + $0x78] sm:$0xf]
    %v711 = vld [vmem:[#allocation4 + $0x7c] sm:$0xf]
    %v712 = vld [vmem:[#allocation4 + $0x80] sm:$0xf]
    %v713 = vld [vmem:[#allocation4 + $0x84] sm:$0xf]
    %v714 = vld [vmem:[#allocation4 + $0x88] sm:$0xf]
    %v715 = vld [vmem:[#allocation4 + $0x8c] sm:$0xf]
    %v716 = vld [vmem:[#allocation4 + $0x90] sm:$0xf]
    %v717 = vld [vmem:[#allocation4 + $0x94] sm:$0xf]
    %v718 = vld [vmem:[#allocation4 + $0x98] sm:$0xf]
    %v719 = vld [vmem:[#allocation4 + $0x9c] sm:$0xf]
    %v720 = vld [vmem:[#allocation4 + $0xa0] sm:$0xf]
    %v721 = vld [vmem:[#allocation4 + $0xa4] sm:$0xf]
    %v722 = vld [vmem:[#allocation4 + $0xa8] sm:$0xf]
    %v723 = vld [vmem:[#allocation4 + $0xac] sm:$0xf]
    %v724 = vld [vmem:[#allocation4 + $0xb0] sm:$0xf]
    %v725 = vld [vmem:[#allocation4 + $0xb4] sm:$0xf]
    %v726 = vld [vmem:[#allocation4 + $0xb8] sm:$0xf]
    %v727 = vld [vmem:[#allocation4 + $0xbc] sm:$0xf]
    %v776 = vunpack.c.l.b16 %v680
    %v777 = vunpack.c.l.b16 %v681
    %v778 = vunpack.c.l.b16 %v682
    %v779 = vunpack.c.l.b16 %v683
    %v780 = vunpack.c.l.b16 %v684
    %v781 = vunpack.c.l.b16 %v685
    %v782 = vunpack.c.l.b16 %v686
    %v783 = vunpack.c.l.b16 %v687
    %v784 = vunpack.c.l.b16 %v688
    %v785 = vunpack.c.l.b16 %v689
    %v786 = vunpack.c.l.b16 %v690
    %v787 = vunpack.c.l.b16 %v691
    %v788 = vunpack.c.l.b16 %v692
    %v789 = vunpack.c.l.b16 %v693
    %v790 = vunpack.c.l.b16 %v694
    %v791 = vunpack.c.l.b16 %v695
    %v792 = vunpack.c.l.b16 %v696
    %v793 = vunpack.c.l.b16 %v697
    %v794 = vunpack.c.l.b16 %v698
    %v795 = vunpack.c.l.b16 %v699
    %v796 = vunpack.c.l.b16 %v700
    %v797 = vunpack.c.l.b16 %v701
    %v798 = vunpack.c.l.b16 %v702
    %v799 = vunpack.c.l.b16 %v703
    %v800 = vunpack.c.l.b16 %v704
    %v801 = vunpack.c.l.b16 %v705
    %v802 = vunpack.c.l.b16 %v706
    %v803 = vunpack.c.l.b16 %v707
    %v804 = vunpack.c.l.b16 %v708
    %v805 = vunpack.c.l.b16 %v709
    %v806 = vunpack.c.l.b16 %v710
    %v807 = vunpack.c.l.b16 %v711
    %v808 = vunpack.c.l.b16 %v712
    %v809 = vunpack.c.l.b16 %v713
    %v810 = vunpack.c.l.b16 %v714
    %v811 = vunpack.c.l.b16 %v715
    %v812 = vunpack.c.l.b16 %v716
    %v813 = vunpack.c.l.b16 %v717
    %v814 = vunpack.c.l.b16 %v718
    %v815 = vunpack.c.l.b16 %v719
    %v816 = vunpack.c.l.b16 %v720
    %v817 = vunpack.c.l.b16 %v721
    %v818 = vunpack.c.l.b16 %v722
    %v819 = vunpack.c.l.b16 %v723
    %v820 = vunpack.c.l.b16 %v724
    %v821 = vunpack.c.l.b16 %v725
    %v822 = vunpack.c.l.b16 %v726
    %v823 = vunpack.c.l.b16 %v727
    %v824 = vpack.c.b16 %v777, %v776
    %v825 = vpack.c.b16 %v779, %v778
    %v826 = vpack.c.b16 %v781, %v780
    %v827 = vpack.c.b16 %v783, %v782
    %v828 = vpack.c.b16 %v785, %v784
    %v829 = vpack.c.b16 %v787, %v786
    %v830 = vpack.c.b16 %v789, %v788
    %v831 = vpack.c.b16 %v791, %v790
    %v832 = vpack.c.b16 %v793, %v792
    %v833 = vpack.c.b16 %v795, %v794
    %v834 = vpack.c.b16 %v797, %v796
    %v835 = vpack.c.b16 %v799, %v798
    %v836 = vpack.c.b16 %v801, %v800
    %v837 = vpack.c.b16 %v803, %v802
    %v838 = vpack.c.b16 %v805, %v804
    %v839 = vpack.c.b16 %v807, %v806
    %v840 = vpack.c.b16 %v809, %v808
    %v841 = vpack.c.b16 %v811, %v810
    %v842 = vpack.c.b16 %v813, %v812
    %v843 = vpack.c.b16 %v815, %v814
    %v844 = vpack.c.b16 %v817, %v816
    %v845 = vpack.c.b16 %v819, %v818
    %v846 = vpack.c.b16 %v821, %v820
    %v847 = vpack.c.b16 %v823, %v822
    %872 = vmatpush.bf16.msra.mxu0 %v831
    %873 = vmatpush.bf16.msra.mxu0 %v830
    %874 = vmatpush.bf16.msra.mxu0 %v829
    %875 = vmatpush.bf16.msra.mxu0 %v828
    %876 = vmatpush.bf16.msra.mxu0 %v827
    %877 = vmatpush.bf16.msra.mxu0 %v826
    %878 = vmatpush.bf16.msra.mxu0 %v825
    %879 = vmatpush.bf16.msra.mxu0 %v824
    %880 = vmatmul.bf16.gmra.mxu0 %v158
    %v881 = vpop.f32.mrf.mxu0
    %v882 = vadd.f32 0.0, %v881
    %v883 = vpop.f32.mrf.mxu0
    %v884 = vadd.f32 0.0, %v883
    %885 = vdwg.mxu0
    %886 = vmatpush.bf16.msra.mxu0 %v839
    %887 = vmatpush.bf16.msra.mxu0 %v838
    %888 = vmatpush.bf16.msra.mxu0 %v837
    %889 = vmatpush.bf16.msra.mxu0 %v836
    %890 = vmatpush.bf16.msra.mxu0 %v835
    %891 = vmatpush.bf16.msra.mxu0 %v834
    %892 = vmatpush.bf16.msra.mxu0 %v833
    %893 = vmatpush.bf16.msra.mxu0 %v832
    %894 = vmatmul.bf16.gmra.mxu0 %v159
    %v895 = vpop.f32.mrf.mxu0
    %v896 = vadd.f32 %v882, %v895
    %v897 = vpop.f32.mrf.mxu0
    %v898 = vadd.f32 %v884, %v897
    %899 = vdwg.mxu0
    %900 = vmatpush.bf16.msra.mxu0 %v847
    %901 = vmatpush.bf16.msra.mxu0 %v846
    %902 = vmatpush.bf16.msra.mxu0 %v845
    %903 = vmatpush.bf16.msra.mxu0 %v844
    %904 = vmatpush.bf16.msra.mxu0 %v843
    %905 = vmatpush.bf16.msra.mxu0 %v842
    %906 = vmatpush.bf16.msra.mxu0 %v841
    %907 = vmatpush.bf16.msra.mxu0 %v840
    %908 = vmatmul.bf16.gmra.mxu0 %v160
    %v909 = vpop.f32.mrf.mxu0
    %v910 = vadd.f32 %v896, %v909
    %v911 = vpop.f32.mrf.mxu0
    %v912 = vadd.f32 %v898, %v911
    %913 = vdwg.mxu0
    %vm914 = vcmask 195584
    %915 = vst.msk [vmem:[%s4] sm:$0xff] %vm914, %v910
    %916 = vst.msk [vmem:[%s4 + $0x8] sm:$0xff] %vm914, %v912
    // Predicated region
    $region22: #{_lambda_.4} parent=1 // pred_check
      _
    $region23: #{_lambda_.4} parent=1 // pred_check_branch
      %918 = sbr.rel (0) target = $region25
    $region24: #{_lambda_.4} parent=1 // pred_region
      _
    $region25: #{_lambda_.4} parent=1 // pred_fallthru
      _
    // Predicated region
    $region26: #{_lambda_.4} parent=1 // pred_check
      _
    $region27: #{_lambda_.4} parent=1 // pred_check_branch
      %920 = sbr.rel (0) target = $region29
    $region28: #{_lambda_.4} parent=1 // pred_region
      _
    $region29: #{_lambda_.4} parent=1 // pred_fallthru
      _
    // Predicated region
    $region30: #{_lambda_.4} parent=1 // pred_check
      _
    $region31: #{_lambda_.4} parent=1 // pred_check_branch
      %922 = sbr.rel (0) target = $region33
    $region32: #{_lambda_.4} parent=1 // pred_region
      _
    $region33: #{_lambda_.4} parent=1 // pred_fallthru
      _
    // Predicated region
    $region34: #{_lambda_.4} parent=1 // pred_check
      _
    $region35: #{_lambda_.4} parent=1 // pred_check_branch
      %924 = sbr.rel (0) target = $region37
    $region36: #{_lambda_.4} parent=1 // pred_region
      _
    $region37: #{_lambda_.4} parent=1 // pred_fallthru
      _
    %925 = vsyncpa [#allocation3], 1
    %926 = vsyncpa [#allocation5], 1

// kernel: _lambda_.6
$region0: #{_lambda_.6}
  #allocation0 [shape = 'u32[]', space=smem, size = 0x4, offset = 0x4, fixed_abs, tag = 'smem constant byte address 0x4 - core index']
  #allocation1 [shape = 'u32[72,128]{1,0:T(1,128)}', space=vmem, size = 0x9000, scoped, tag = 'internal scratch']
  %s0 = inlined_call_operand.vmem [shape: bf16[16,128], index: 0, kind: input, shape index: {}]
  %s1 = inlined_call_operand.vmem [shape: bf16[128,384], index: 1, kind: input, shape index: {}]
  %s2 = inlined_call_operand.vmem [shape: bf16[128,6], index: 2, kind: input, shape index: {}]
  %s3 = inlined_call_operand.vmem [shape: f32[16,384], index: 3, kind: output, shape index: {0}]
  %s4 = inlined_call_operand.vmem [shape: f32[16,6], index: 4, kind: output, shape index: {1}]
  %5 = xla_tuple %s3, %s4
  %s6 = sld [smem:[#allocation0]]
  $region30: #{_lambda_.6} parent=0
    _
  %s8 = ssub.s32 1, %s6
  %s9 = scalar_select 0, %s8, %s6
  // Predicated region
  $region2: #{_lambda_.6} parent=0 // pred_check
    _
  $region3: #{_lambda_.6} parent=0 // pred_check_branch
    %11 = sbr.rel (0) target = $region5
  $region4: #{_lambda_.6} parent=0 // pred_region
    _
  $region5: #{_lambda_.6} parent=0 // pred_fallthru
    _
  // Predicated region
  $region6: #{_lambda_.6} parent=0 // pred_check
    _
  $region7: #{_lambda_.6} parent=0 // pred_check_branch
    %13 = sbr.rel (0) target = $region9
  $region8: #{_lambda_.6} parent=0 // pred_region
    _
  $region9: #{_lambda_.6} parent=0 // pred_fallthru
    _
  // Predicated region
  $region10: #{_lambda_.6} parent=0 // pred_check
    _
  $region11: #{_lambda_.6} parent=0 // pred_check_branch
    %15 = sbr.rel (0) target = $region13
  $region12: #{_lambda_.6} parent=0 // pred_region
    _
  $region13: #{_lambda_.6} parent=0 // pred_fallthru
    _
  %v16 = vld [vmem:[%s0] sm:$0xf]
  %v17 = vld [vmem:[%s0 + $0x4] sm:$0xf]
  %v18 = vld [vmem:[%s1] sm:$0xff]
  %v19 = vld [vmem:[%s1 + $0x8] sm:$0xf]
  %v20 = vld [vmem:[%s1 + $0xc] sm:$0xff]
  %v21 = vld [vmem:[%s1 + $0x14] sm:$0xf]
  %v22 = vld [vmem:[%s1 + $0x18] sm:$0xff]
  %v23 = vld [vmem:[%s1 + $0x20] sm:$0xf]
  %v24 = vld [vmem:[%s1 + $0x24] sm:$0xff]
  %v25 = vld [vmem:[%s1 + $0x2c] sm:$0xf]
  %v26 = vld [vmem:[%s1 + $0x30] sm:$0xff]
  %v27 = vld [vmem:[%s1 + $0x38] sm:$0xf]
  %v28 = vld [vmem:[%s1 + $0x3c] sm:$0xff]
  %v29 = vld [vmem:[%s1 + $0x44] sm:$0xf]
  %v30 = vld [vmem:[%s1 + $0x48] sm:$0xff]
  %v31 = vld [vmem:[%s1 + $0x50] sm:$0xf]
  %v32 = vld [vmem:[%s1 + $0x54] sm:$0xff]
  %v33 = vld [vmem:[%s1 + $0x5c] sm:$0xf]
  %v34 = vld [vmem:[%s1 + $0x60] sm:$0xff]
  %v35 = vld [vmem:[%s1 + $0x68] sm:$0xf]
  %v36 = vld [vmem:[%s1 + $0x6c] sm:$0xff]
  %v37 = vld [vmem:[%s1 + $0x74] sm:$0xf]
  %v38 = vld [vmem:[%s1 + $0x78] sm:$0xff]
  %v39 = vld [vmem:[%s1 + $0x80] sm:$0xf]
  %v40 = vld [vmem:[%s1 + $0x84] sm:$0xff]
  %v41 = vld [vmem:[%s1 + $0x8c] sm:$0xf]
  %v42 = vld [vmem:[%s1 + $0x90] sm:$0xff]
  %v43 = vld [vmem:[%s1 + $0x98] sm:$0xf]
  %v44 = vld [vmem:[%s1 + $0x9c] sm:$0xff]
  %v45 = vld [vmem:[%s1 + $0xa4] sm:$0xf]
  %v46 = vld [vmem:[%s1 + $0xa8] sm:$0xff]
  %v47 = vld [vmem:[%s1 + $0xb0] sm:$0xf]
  %v48 = vld [vmem:[%s1 + $0xb4] sm:$0xff]
  %v49 = vld [vmem:[%s1 + $0xbc] sm:$0xf]
  %v52 = vunpack.c.l.b16 %v16
  %v53 = vunpack.c.l.b16 %v17
  %v54 = vpack.c.b16 %v53, %v52
  %v88 = vunpack.c.l.b16 %v18
  %v89 = vunpack.c.h.b16 %v18
  %v90 = vunpack.c.l.b16 %v19
  %v91 = vunpack.c.l.b16 %v20
  %v92 = vunpack.c.h.b16 %v20
  %v93 = vunpack.c.l.b16 %v21
  %v94 = vunpack.c.l.b16 %v22
  %v95 = vunpack.c.h.b16 %v22
  %v96 = vunpack.c.l.b16 %v23
  %v97 = vunpack.c.l.b16 %v24
  %v98 = vunpack.c.h.b16 %v24
  %v99 = vunpack.c.l.b16 %v25
  %v100 = vunpack.c.l.b16 %v26
  %v101 = vunpack.c.h.b16 %v26
  %v102 = vunpack.c.l.b16 %v27
  %v103 = vunpack.c.l.b16 %v28
  %v104 = vunpack.c.h.b16 %v28
  %v105 = vunpack.c.l.b16 %v29
  %v106 = vunpack.c.l.b16 %v30
  %v107 = vunpack.c.h.b16 %v30
  %v108 = vunpack.c.l.b16 %v31
  %v109 = vunpack.c.l.b16 %v32
  %v110 = vunpack.c.h.b16 %v32
  %v111 = vunpack.c.l.b16 %v33
  %v112 = vunpack.c.l.b16 %v34
  %v113 = vunpack.c.h.b16 %v34
  %v114 = vunpack.c.l.b16 %v35
  %v115 = vunpack.c.l.b16 %v36
  %v116 = vunpack.c.h.b16 %v36
  %v117 = vunpack.c.l.b16 %v37
  %v118 = vunpack.c.l.b16 %v38
  %v119 = vunpack.c.h.b16 %v38
  %v120 = vunpack.c.l.b16 %v39
  %v121 = vunpack.c.l.b16 %v40
  %v122 = vunpack.c.h.b16 %v40
  %v123 = vunpack.c.l.b16 %v41
  %v124 = vunpack.c.l.b16 %v42
  %v125 = vunpack.c.h.b16 %v42
  %v126 = vunpack.c.l.b16 %v43
  %v127 = vunpack.c.l.b16 %v44
  %v128 = vunpack.c.h.b16 %v44
  %v129 = vunpack.c.l.b16 %v45
  %v130 = vunpack.c.l.b16 %v46
  %v131 = vunpack.c.h.b16 %v46
  %v132 = vunpack.c.l.b16 %v47
  %v133 = vunpack.c.l.b16 %v48
  %v134 = vunpack.c.h.b16 %v48
  %v135 = vunpack.c.l.b16 %v49
  %v136 = vpack.c.b16 %v91, %v88
  %v137 = vpack.c.b16 %v92, %v89
  %v138 = vpack.c.b16 %v93, %v90
  %v139 = vpack.c.b16 %v97, %v94
  %v140 = vpack.c.b16 %v98, %v95
  %v141 = vpack.c.b16 %v99, %v96
  %v142 = vpack.c.b16 %v103, %v100
  %v143 = vpack.c.b16 %v104, %v101
  %v144 = vpack.c.b16 %v105, %v102
  %v145 = vpack.c.b16 %v109, %v106
  %v146 = vpack.c.b16 %v110, %v107
  %v147 = vpack.c.b16 %v111, %v108
  %v148 = vpack.c.b16 %v115, %v112
  %v149 = vpack.c.b16 %v116, %v113
  %v150 = vpack.c.b16 %v117, %v114
  %v151 = vpack.c.b16 %v121, %v118
  %v152 = vpack.c.b16 %v122, %v119
  %v153 = vpack.c.b16 %v123, %v120
  %v154 = vpack.c.b16 %v127, %v124
  %v155 = vpack.c.b16 %v128, %v125
  %v156 = vpack.c.b16 %v129, %v126
  %v157 = vpack.c.b16 %v133, %v130
  %v158 = vpack.c.b16 %v134, %v131
  %v159 = vpack.c.b16 %v135, %v132
  %184 = vmatpush.bf16.msra.mxu0 %v157
  %185 = vmatpush.bf16.msra.mxu0 %v154
  %186 = vmatpush.bf16.msra.mxu0 %v151
  %187 = vmatpush.bf16.msra.mxu0 %v148
  %188 = vmatpush.bf16.msra.mxu0 %v145
  %189 = vmatpush.bf16.msra.mxu0 %v142
  %190 = vmatpush.bf16.msra.mxu0 %v139
  %191 = vmatpush.bf16.msra.mxu0 %v136
  %192 = vmatmul.bf16.gmra.mxu0 %v54
  %v193 = vpop.f32.mrf.mxu0
  %v194 = vadd.f32 0.0, %v193
  %v195 = vpop.f32.mrf.mxu0
  %v196 = vadd.f32 0.0, %v195
  %197 = vdwg.mxu0
  %198 = vmatpush.bf16.msra.mxu0 %v158
  %199 = vmatpush.bf16.msra.mxu0 %v155
  %200 = vmatpush.bf16.msra.mxu0 %v152
  %201 = vmatpush.bf16.msra.mxu0 %v149
  %202 = vmatpush.bf16.msra.mxu0 %v146
  %203 = vmatpush.bf16.msra.mxu0 %v143
  %204 = vmatpush.bf16.msra.mxu0 %v140
  %205 = vmatpush.bf16.msra.mxu0 %v137
  %206 = vmatmul.bf16.gmra.mxu0 %v54
  %v207 = vpop.f32.mrf.mxu0
  %v208 = vadd.f32 0.0, %v207
  %v209 = vpop.f32.mrf.mxu0
  %v210 = vadd.f32 0.0, %v209
  %211 = vdwg.mxu0
  %212 = vmatpush.bf16.msra.mxu0 %v159
  %213 = vmatpush.bf16.msra.mxu0 %v156
  %214 = vmatpush.bf16.msra.mxu0 %v153
  %215 = vmatpush.bf16.msra.mxu0 %v150
  %216 = vmatpush.bf16.msra.mxu0 %v147
  %217 = vmatpush.bf16.msra.mxu0 %v144
  %218 = vmatpush.bf16.msra.mxu0 %v141
  %219 = vmatpush.bf16.msra.mxu0 %v138
  %220 = vmatmul.bf16.gmra.mxu0 %v54
  %v221 = vpop.f32.mrf.mxu0
  %v222 = vadd.f32 0.0, %v221
  %v223 = vpop.f32.mrf.mxu0
  %v224 = vadd.f32 0.0, %v223
  %225 = vdwg.mxu0
  %226 = vst [vmem:[%s3] sm:$0xff] %v194
  %227 = vst [vmem:[%s3 + $0x8] sm:$0xff] %v208
  %228 = vst [vmem:[%s3 + $0x10] sm:$0xff] %v222
  %229 = vst [vmem:[%s3 + $0x18] sm:$0xff] %v196
  %230 = vst [vmem:[%s3 + $0x20] sm:$0xff] %v210
  %231 = vst [vmem:[%s3 + $0x28] sm:$0xff] %v224
  %v232 = vld [vmem:[%s2] sm:$0xf]
  %v233 = vld [vmem:[%s2 + $0x4] sm:$0xf]
  %v234 = vld [vmem:[%s2 + $0x8] sm:$0xf]
  %v235 = vld [vmem:[%s2 + $0xc] sm:$0xf]
  %v236 = vld [vmem:[%s2 + $0x10] sm:$0xf]
  %v237 = vld [vmem:[%s2 + $0x14] sm:$0xf]
  %v238 = vld [vmem:[%s2 + $0x18] sm:$0xf]
  %v239 = vld [vmem:[%s2 + $0x1c] sm:$0xf]
  %v240 = vld [vmem:[%s2 + $0x20] sm:$0xf]
  %v241 = vld [vmem:[%s2 + $0x24] sm:$0xf]
  %v242 = vld [vmem:[%s2 + $0x28] sm:$0xf]
  %v243 = vld [vmem:[%s2 + $0x2c] sm:$0xf]
  %v244 = vld [vmem:[%s2 + $0x30] sm:$0xf]
  %v245 = vld [vmem:[%s2 + $0x34] sm:$0xf]
  %v246 = vld [vmem:[%s2 + $0x38] sm:$0xf]
  %v247 = vld [vmem:[%s2 + $0x3c] sm:$0xf]
  %v264 = vunpack.c.l.b16 %v232
  %v265 = vunpack.c.l.b16 %v233
  %v266 = vunpack.c.l.b16 %v234
  %v267 = vunpack.c.l.b16 %v235
  %v268 = vunpack.c.l.b16 %v236
  %v269 = vunpack.c.l.b16 %v237
  %v270 = vunpack.c.l.b16 %v238
  %v271 = vunpack.c.l.b16 %v239
  %v272 = vunpack.c.l.b16 %v240
  %v273 = vunpack.c.l.b16 %v241
  %v274 = vunpack.c.l.b16 %v242
  %v275 = vunpack.c.l.b16 %v243
  %v276 = vunpack.c.l.b16 %v244
  %v277 = vunpack.c.l.b16 %v245
  %v278 = vunpack.c.l.b16 %v246
  %v279 = vunpack.c.l.b16 %v247
  %v280 = vpack.c.b16 %v265, %v264
  %v281 = vpack.c.b16 %v267, %v266
  %v282 = vpack.c.b16 %v269, %v268
  %v283 = vpack.c.b16 %v271, %v270
  %v284 = vpack.c.b16 %v273, %v272
  %v285 = vpack.c.b16 %v275, %v274
  %v286 = vpack.c.b16 %v277, %v276
  %v287 = vpack.c.b16 %v279, %v278
  %296 = vmatpush.bf16.msra.mxu0 %v287
  %297 = vmatpush.bf16.msra.mxu0 %v286
  %298 = vmatpush.bf16.msra.mxu0 %v285
  %299 = vmatpush.bf16.msra.mxu0 %v284
  %300 = vmatpush.bf16.msra.mxu0 %v283
  %301 = vmatpush.bf16.msra.mxu0 %v282
  %302 = vmatpush.bf16.msra.mxu0 %v281
  %303 = vmatpush.bf16.msra.mxu0 %v280
  %304 = vmatmul.bf16.gmra.mxu0 %v54
  %v305 = vpop.f32.mrf.mxu0
  %v306 = vadd.f32 0.0, %v305
  %v307 = vpop.f32.mrf.mxu0
  %v308 = vadd.f32 0.0, %v307
  %309 = vdwg.mxu0
  %vm310 = vcmask 48128
  %311 = vst.msk [vmem:[%s4] sm:$0xff] %vm310, %v306
  %312 = vst.msk [vmem:[%s4 + $0x8] sm:$0xff] %vm310, %v308
  // Predicated region
  $region14: #{_lambda_.6} parent=0 // pred_check
    _
  $region15: #{_lambda_.6} parent=0 // pred_check_branch
    %314 = sbr.rel (0) target = $region17
  $region16: #{_lambda_.6} parent=0 // pred_region
    _
  $region17: #{_lambda_.6} parent=0 // pred_fallthru
    _
  // Predicated region
  $region18: #{_lambda_.6} parent=0 // pred_check
    _
  $region19: #{_lambda_.6} parent=0 // pred_check_branch
    %316 = sbr.rel (0) target = $region21
  $region20: #{_lambda_.6} parent=0 // pred_region
    _
  $region21: #{_lambda_.6} parent=0 // pred_fallthru
    _
  // Predicated region
  $region22: #{_lambda_.6} parent=0 // pred_check
    _
  $region23: #{_lambda_.6} parent=0 // pred_check_branch
    %318 = sbr.rel (0) target = $region25
  $region24: #{_lambda_.6} parent=0 // pred_region
    _
  $region25: #{_lambda_.6} parent=0 // pred_fallthru
    _
  // Predicated region
  $region26: #{_lambda_.6} parent=0 // pred_check
    _
  $region27: #{_lambda_.6} parent=0 // pred_check_branch
    %320 = sbr.rel (0) target = $region29
  $region28: #{_lambda_.6} parent=0 // pred_region
    _
  $region29: #{_lambda_.6} parent=0 // pred_fallthru
    _

// kernel: _lambda_.5
$region0: #{_lambda_.5}
  #allocation0 [shape = 'u32[]', space=smem, size = 0x4, offset = 0x4, fixed_abs, tag = 'smem constant byte address 0x4 - core index']
  #allocation1 [shape = 'u32[72,128]{1,0:T(1,128)}', space=vmem, size = 0x9000, scoped, tag = 'internal scratch']
  #allocation2 [shape = 'f32[32,1,128]{2,1,0:T(1,128)}', space=vmem, size = 0x4000, scoped, tag = 'scratch operand']
  #allocation3 [shape = 's32[1]{0}', space=sflag, size = 0x4, scoped, tag = 'scoped memory for _lambda_.5']
  #allocation4 [shape = 'u8[512]{0}', space=smem, size = 0x200, scoped, tag = 'prefetched SMEM operand 0']
  %s0 = inlined_call_operand.vmem [shape: s32[32], index: 0, kind: input, shape index: {}]
  %s1 = inlined_call_operand.vmem [shape: f32[32,1,128], index: 1, kind: input, shape index: {}]
  %s2 = inlined_call_operand.vmem [shape: f32[32,1,128], index: 2, kind: input, shape index: {}]
  %s3 = inlined_call_operand.vmem [shape: f32[1,1,128], index: 3, kind: input, shape index: {}]
  %s4 = inlined_call_operand.vmem [shape: f32[16,1,128], index: 4, kind: output, shape index: {}]
  %s5 = sld [smem:[#allocation0]]
  $region37: #{_lambda_.5} parent=0
    _
  %s7 = ssub.s32 1, %s5
  %s8 = scalar_select 0, %s7, %s5
  %s10 = sshll.u32 %s0, 4
  %s11 = int_to_ptr.vmem [resolvable:$true] %s10
  %13 = dma.vmem_to_smem %s11, 16, [#allocation4], [#allocation3]
  %15 = dma.done [#allocation3], 16
  %16 = sfence
  // Predicated region
  $region2: #{_lambda_.5} parent=0 // pred_check
    _
  $region3: #{_lambda_.5} parent=0 // pred_check_branch
    %18 = sbr.rel (0) target = $region5
  $region4: #{_lambda_.5} parent=0 // pred_region
    _
  $region5: #{_lambda_.5} parent=0 // pred_fallthru
    _
  // Predicated region
  $region6: #{_lambda_.5} parent=0 // pred_check
    _
  $region7: #{_lambda_.5} parent=0 // pred_check_branch
    %20 = sbr.rel (0) target = $region9
  $region8: #{_lambda_.5} parent=0 // pred_region
    _
  $region9: #{_lambda_.5} parent=0 // pred_fallthru
    _
  // Predicated region
  $region10: #{_lambda_.5} parent=0 // pred_check
    _
  $region11: #{_lambda_.5} parent=0 // pred_check_branch
    %22 = sbr.rel (0) target = $region13
  $region12: #{_lambda_.5} parent=0 // pred_region
    _
  $region13: #{_lambda_.5} parent=0 // pred_fallthru
    _
  %p23 = scmp.eq.s32.totalorder 0, 0
  // Predicated region
  $region14: #{_lambda_.5} parent=0 // pred_check
    %p24 = pneg %p23
  $region15: #{_lambda_.5} parent=0 // pred_check_branch
    %26 = sbr.rel (%p24) target = $region17
  $region16: #{_lambda_.5} parent=0 // pred_region
    %27 = vst [vmem:[%s4] sm:$0x1] 0.0
    %28 = vst [vmem:[%s4 + $0x1] sm:$0x1] 0.0
    %29 = vst [vmem:[%s4 + $0x2] sm:$0x1] 0.0
    %30 = vst [vmem:[%s4 + $0x3] sm:$0x1] 0.0
    %31 = vst [vmem:[%s4 + $0x4] sm:$0x1] 0.0
    %32 = vst [vmem:[%s4 + $0x5] sm:$0x1] 0.0
    %33 = vst [vmem:[%s4 + $0x6] sm:$0x1] 0.0
    %34 = vst [vmem:[%s4 + $0x7] sm:$0x1] 0.0
    %35 = vst [vmem:[%s4 + $0x8] sm:$0x1] 0.0
    %36 = vst [vmem:[%s4 + $0x9] sm:$0x1] 0.0
    %37 = vst [vmem:[%s4 + $0xa] sm:$0x1] 0.0
    %38 = vst [vmem:[%s4 + $0xb] sm:$0x1] 0.0
    %39 = vst [vmem:[%s4 + $0xc] sm:$0x1] 0.0
    %40 = vst [vmem:[%s4 + $0xd] sm:$0x1] 0.0
    %41 = vst [vmem:[%s4 + $0xe] sm:$0x1] 0.0
    %42 = vst [vmem:[%s4 + $0xf] sm:$0x1] 0.0
  $region17: #{_lambda_.5} parent=0 // pred_fallthru
    _
  %v43 = vld [vmem:[%s1] sm:$0x1]
  %v44 = vld [vmem:[%s1 + $0x1] sm:$0x1]
  %v45 = vld [vmem:[%s1 + $0x2] sm:$0x1]
  %v46 = vld [vmem:[%s1 + $0x3] sm:$0x1]
  %v47 = vld [vmem:[%s1 + $0x4] sm:$0x1]
  %v48 = vld [vmem:[%s1 + $0x5] sm:$0x1]
  %v49 = vld [vmem:[%s1 + $0x6] sm:$0x1]
  %v50 = vld [vmem:[%s1 + $0x7] sm:$0x1]
  %v51 = vld [vmem:[%s1 + $0x8] sm:$0x1]
  %v52 = vld [vmem:[%s1 + $0x9] sm:$0x1]
  %v53 = vld [vmem:[%s1 + $0xa] sm:$0x1]
  %v54 = vld [vmem:[%s1 + $0xb] sm:$0x1]
  %v55 = vld [vmem:[%s1 + $0xc] sm:$0x1]
  %v56 = vld [vmem:[%s1 + $0xd] sm:$0x1]
  %v57 = vld [vmem:[%s1 + $0xe] sm:$0x1]
  %v58 = vld [vmem:[%s1 + $0xf] sm:$0x1]
  %v59 = vld [vmem:[%s1 + $0x10] sm:$0x1]
  %v60 = vld [vmem:[%s1 + $0x11] sm:$0x1]
  %v61 = vld [vmem:[%s1 + $0x12] sm:$0x1]
  %v62 = vld [vmem:[%s1 + $0x13] sm:$0x1]
  %v63 = vld [vmem:[%s1 + $0x14] sm:$0x1]
  %v64 = vld [vmem:[%s1 + $0x15] sm:$0x1]
  %v65 = vld [vmem:[%s1 + $0x16] sm:$0x1]
  %v66 = vld [vmem:[%s1 + $0x17] sm:$0x1]
  %v67 = vld [vmem:[%s1 + $0x18] sm:$0x1]
  %v68 = vld [vmem:[%s1 + $0x19] sm:$0x1]
  %v69 = vld [vmem:[%s1 + $0x1a] sm:$0x1]
  %v70 = vld [vmem:[%s1 + $0x1b] sm:$0x1]
  %v71 = vld [vmem:[%s1 + $0x1c] sm:$0x1]
  %v72 = vld [vmem:[%s1 + $0x1d] sm:$0x1]
  %v73 = vld [vmem:[%s1 + $0x1e] sm:$0x1]
  %v74 = vld [vmem:[%s1 + $0x1f] sm:$0x1]
  %v75 = vld [vmem:[%s2] sm:$0x1]
  %v76 = vld [vmem:[%s2 + $0x1] sm:$0x1]
  %v77 = vld [vmem:[%s2 + $0x2] sm:$0x1]
  %v78 = vld [vmem:[%s2 + $0x3] sm:$0x1]
  %v79 = vld [vmem:[%s2 + $0x4] sm:$0x1]
  %v80 = vld [vmem:[%s2 + $0x5] sm:$0x1]
  %v81 = vld [vmem:[%s2 + $0x6] sm:$0x1]
  %v82 = vld [vmem:[%s2 + $0x7] sm:$0x1]
  %v83 = vld [vmem:[%s2 + $0x8] sm:$0x1]
  %v84 = vld [vmem:[%s2 + $0x9] sm:$0x1]
  %v85 = vld [vmem:[%s2 + $0xa] sm:$0x1]
  %v86 = vld [vmem:[%s2 + $0xb] sm:$0x1]
  %v87 = vld [vmem:[%s2 + $0xc] sm:$0x1]
  %v88 = vld [vmem:[%s2 + $0xd] sm:$0x1]
  %v89 = vld [vmem:[%s2 + $0xe] sm:$0x1]
  %v90 = vld [vmem:[%s2 + $0xf] sm:$0x1]
  %v91 = vld [vmem:[%s2 + $0x10] sm:$0x1]
  %v92 = vld [vmem:[%s2 + $0x11] sm:$0x1]
  %v93 = vld [vmem:[%s2 + $0x12] sm:$0x1]
  %v94 = vld [vmem:[%s2 + $0x13] sm:$0x1]
  %v95 = vld [vmem:[%s2 + $0x14] sm:$0x1]
  %v96 = vld [vmem:[%s2 + $0x15] sm:$0x1]
  %v97 = vld [vmem:[%s2 + $0x16] sm:$0x1]
  %v98 = vld [vmem:[%s2 + $0x17] sm:$0x1]
  %v99 = vld [vmem:[%s2 + $0x18] sm:$0x1]
  %v100 = vld [vmem:[%s2 + $0x19] sm:$0x1]
  %v101 = vld [vmem:[%s2 + $0x1a] sm:$0x1]
  %v102 = vld [vmem:[%s2 + $0x1b] sm:$0x1]
  %v103 = vld [vmem:[%s2 + $0x1c] sm:$0x1]
  %v104 = vld [vmem:[%s2 + $0x1d] sm:$0x1]
  %v105 = vld [vmem:[%s2 + $0x1e] sm:$0x1]
  %v106 = vld [vmem:[%s2 + $0x1f] sm:$0x1]
  %v107 = vmul.f32 %v43, %v75
  %v108 = vmul.f32 %v44, %v76
  %v109 = vmul.f32 %v45, %v77
  %v110 = vmul.f32 %v46, %v78
  %v111 = vmul.f32 %v47, %v79
  %v112 = vmul.f32 %v48, %v80
  %v113 = vmul.f32 %v49, %v81
  %v114 = vmul.f32 %v50, %v82
  %v115 = vmul.f32 %v51, %v83
  %v116 = vmul.f32 %v52, %v84
  %v117 = vmul.f32 %v53, %v85
  %v118 = vmul.f32 %v54, %v86
  %v119 = vmul.f32 %v55, %v87
  %v120 = vmul.f32 %v56, %v88
  %v121 = vmul.f32 %v57, %v89
  %v122 = vmul.f32 %v58, %v90
  %v123 = vmul.f32 %v59, %v91
  %v124 = vmul.f32 %v60, %v92
  %v125 = vmul.f32 %v61, %v93
  %v126 = vmul.f32 %v62, %v94
  %v127 = vmul.f32 %v63, %v95
  %v128 = vmul.f32 %v64, %v96
  %v129 = vmul.f32 %v65, %v97
  %v130 = vmul.f32 %v66, %v98
  %v131 = vmul.f32 %v67, %v99
  %v132 = vmul.f32 %v68, %v100
  %v133 = vmul.f32 %v69, %v101
  %v134 = vmul.f32 %v70, %v102
  %v135 = vmul.f32 %v71, %v103
  %v136 = vmul.f32 %v72, %v104
  %v137 = vmul.f32 %v73, %v105
  %v138 = vmul.f32 %v74, %v106
  %139 = vst [vmem:[#allocation2] sm:$0x1] %v107
  %140 = vst [vmem:[#allocation2 + $0x1] sm:$0x1] %v108
  %141 = vst [vmem:[#allocation2 + $0x2] sm:$0x1] %v109
  %142 = vst [vmem:[#allocation2 + $0x3] sm:$0x1] %v110
  %143 = vst [vmem:[#allocation2 + $0x4] sm:$0x1] %v111
  %144 = vst [vmem:[#allocation2 + $0x5] sm:$0x1] %v112
  %145 = vst [vmem:[#allocation2 + $0x6] sm:$0x1] %v113
  %146 = vst [vmem:[#allocation2 + $0x7] sm:$0x1] %v114
  %147 = vst [vmem:[#allocation2 + $0x8] sm:$0x1] %v115
  %148 = vst [vmem:[#allocation2 + $0x9] sm:$0x1] %v116
  %149 = vst [vmem:[#allocation2 + $0xa] sm:$0x1] %v117
  %150 = vst [vmem:[#allocation2 + $0xb] sm:$0x1] %v118
  %151 = vst [vmem:[#allocation2 + $0xc] sm:$0x1] %v119
  %152 = vst [vmem:[#allocation2 + $0xd] sm:$0x1] %v120
  %153 = vst [vmem:[#allocation2 + $0xe] sm:$0x1] %v121
  %154 = vst [vmem:[#allocation2 + $0xf] sm:$0x1] %v122
  %155 = vst [vmem:[#allocation2 + $0x10] sm:$0x1] %v123
  %156 = vst [vmem:[#allocation2 + $0x11] sm:$0x1] %v124
  %157 = vst [vmem:[#allocation2 + $0x12] sm:$0x1] %v125
  %158 = vst [vmem:[#allocation2 + $0x13] sm:$0x1] %v126
  %159 = vst [vmem:[#allocation2 + $0x14] sm:$0x1] %v127
  %160 = vst [vmem:[#allocation2 + $0x15] sm:$0x1] %v128
  %161 = vst [vmem:[#allocation2 + $0x16] sm:$0x1] %v129
  %162 = vst [vmem:[#allocation2 + $0x17] sm:$0x1] %v130
  %163 = vst [vmem:[#allocation2 + $0x18] sm:$0x1] %v131
  %164 = vst [vmem:[#allocation2 + $0x19] sm:$0x1] %v132
  %165 = vst [vmem:[#allocation2 + $0x1a] sm:$0x1] %v133
  %166 = vst [vmem:[#allocation2 + $0x1b] sm:$0x1] %v134
  %167 = vst [vmem:[#allocation2 + $0x1c] sm:$0x1] %v135
  %168 = vst [vmem:[#allocation2 + $0x1d] sm:$0x1] %v136
  %169 = vst [vmem:[#allocation2 + $0x1e] sm:$0x1] %v137
  %170 = vst [vmem:[#allocation2 + $0x1f] sm:$0x1] %v138
  %s171 = smul.u32 0, 32
  loop: start=0, step=1, limit=32
  $region18: #{_lambda_.5} parent=0 // loop_pre_header
    _
  $region19: #{_lambda_.5} parent=0 // loop_header
    %s173 = sphi 0, %s177
    %p174 = scmp.ge.s32.totalorder %s173, 32
  $region20: #{_lambda_.5} parent=0 // loop_header_branch
    %176 = sbr.rel (%p174) target = $region24
  $region21: #{_lambda_.5} parent=0 // loop_body
    %s178 = sadd.s32 %s171, %s173
    %s179 = sld [smem:[#allocation4 + %s178]]
    %s180 = scalar_lea.vmem %s4, %s179
    %v181 = vld [vmem:[%s180] sm:$0x1]
    %s182 = scalar_lea.vmem [#allocation2], %s173
    %v183 = vld [vmem:[%s182] sm:$0x1]
    %v184 = vadd.f32 %v181, %v183
    %185 = vst [vmem:[%s180] sm:$0x1] %v184
  $region22: #{_lambda_.5} parent=0 // loop_footer
    %s177 = sadd.s32 1, %s173
  $region23: #{_lambda_.5} parent=0 // loop_footer_branch
    %172 = sbr.rel target = $region19
  $region24: #{_lambda_.5} parent=0 // loop_exit
    _
  // Predicated region
  $region25: #{_lambda_.5} parent=0 // pred_check
    %p186 = pneg %p23
  $region26: #{_lambda_.5} parent=0 // pred_check_branch
    %188 = sbr.rel (%p186) target = $region28
  $region27: #{_lambda_.5} parent=0 // pred_region
    %v189 = vld [vmem:[%s4] sm:$0x1]
    %v190 = vld [vmem:[%s4 + $0x1] sm:$0x1]
    %v191 = vld [vmem:[%s4 + $0x2] sm:$0x1]
    %v192 = vld [vmem:[%s4 + $0x3] sm:$0x1]
    %v193 = vld [vmem:[%s4 + $0x4] sm:$0x1]
    %v194 = vld [vmem:[%s4 + $0x5] sm:$0x1]
    %v195 = vld [vmem:[%s4 + $0x6] sm:$0x1]
    %v196 = vld [vmem:[%s4 + $0x7] sm:$0x1]
    %v197 = vld [vmem:[%s4 + $0x8] sm:$0x1]
    %v198 = vld [vmem:[%s4 + $0x9] sm:$0x1]
    %v199 = vld [vmem:[%s4 + $0xa] sm:$0x1]
    %v200 = vld [vmem:[%s4 + $0xb] sm:$0x1]
    %v201 = vld [vmem:[%s4 + $0xc] sm:$0x1]
    %v202 = vld [vmem:[%s4 + $0xd] sm:$0x1]
    %v203 = vld [vmem:[%s4 + $0xe] sm:$0x1]
    %v204 = vld [vmem:[%s4 + $0xf] sm:$0x1]
    %v205 = vld [vmem:[%s3] sm:$0x1]
    %v206 = vadd.f32 %v189, %v205
    %v207 = vadd.f32 %v190, %v205
    %v208 = vadd.f32 %v191, %v205
    %v209 = vadd.f32 %v192, %v205
    %v210 = vadd.f32 %v193, %v205
    %v211 = vadd.f32 %v194, %v205
    %v212 = vadd.f32 %v195, %v205
    %v213 = vadd.f32 %v196, %v205
    %v214 = vadd.f32 %v197, %v205
    %v215 = vadd.f32 %v198, %v205
    %v216 = vadd.f32 %v199, %v205
    %v217 = vadd.f32 %v200, %v205
    %v218 = vadd.f32 %v201, %v205
    %v219 = vadd.f32 %v202, %v205
    %v220 = vadd.f32 %v203, %v205
    %v221 = vadd.f32 %v204, %v205
    %v222 = vmax.f32 %v206, 0.0
    %v223 = vmax.f32 %v207, 0.0
    %v224 = vmax.f32 %v208, 0.0
    %v225 = vmax.f32 %v209, 0.0
    %v226 = vmax.f32 %v210, 0.0
    %v227 = vmax.f32 %v211, 0.0
    %v228 = vmax.f32 %v212, 0.0
    %v229 = vmax.f32 %v213, 0.0
    %v230 = vmax.f32 %v214, 0.0
    %v231 = vmax.f32 %v215, 0.0
    %v232 = vmax.f32 %v216, 0.0
    %v233 = vmax.f32 %v217, 0.0
    %v234 = vmax.f32 %v218, 0.0
    %v235 = vmax.f32 %v219, 0.0
    %v236 = vmax.f32 %v220, 0.0
    %v237 = vmax.f32 %v221, 0.0
    %238 = vst [vmem:[%s4] sm:$0x1] %v222
    %239 = vst [vmem:[%s4 + $0x1] sm:$0x1] %v223
    %240 = vst [vmem:[%s4 + $0x2] sm:$0x1] %v224
    %241 = vst [vmem:[%s4 + $0x3] sm:$0x1] %v225
    %242 = vst [vmem:[%s4 + $0x4] sm:$0x1] %v226
    %243 = vst [vmem:[%s4 + $0x5] sm:$0x1] %v227
    %244 = vst [vmem:[%s4 + $0x6] sm:$0x1] %v228
    %245 = vst [vmem:[%s4 + $0x7] sm:$0x1] %v229
    %246 = vst [vmem:[%s4 + $0x8] sm:$0x1] %v230
    %247 = vst [vmem:[%s4 + $0x9] sm:$0x1] %v231
    %248 = vst [vmem:[%s4 + $0xa] sm:$0x1] %v232
    %249 = vst [vmem:[%s4 + $0xb] sm:$0x1] %v233
    %250 = vst [vmem:[%s4 + $0xc] sm:$0x1] %v234
    %251 = vst [vmem:[%s4 + $0xd] sm:$0x1] %v235
    %252 = vst [vmem:[%s4 + $0xe] sm:$0x1] %v236
    %253 = vst [vmem:[%s4 + $0xf] sm:$0x1] %v237
  $region28: #{_lambda_.5} parent=0 // pred_fallthru
    _
  // Predicated region
  $region29: #{_lambda_.5} parent=0 // pred_check
    _
  $region30: #{_lambda_.5} parent=0 // pred_check_branch
    %255 = sbr.rel (0) target = $region32
  $region31: #{_lambda_.5} parent=0 // pred_region
    _
  $region32: #{_lambda_.5} parent=0 // pred_fallthru
    _
  // Predicated region
  $region33: #{_lambda_.5} parent=0 // pred_check
    _
  $region34: #{_lambda_.5} parent=0 // pred_check_branch
    %257 = sbr.rel (0) target = $region36
  $region35: #{_lambda_.5} parent=0 // pred_region
    _
  $region36: #{_lambda_.5} parent=0 // pred_fallthru
    _

// kernel: _lambda_.7
$region0: #{_lambda_.7}
  #allocation0 [shape = 'u32[]', space=smem, size = 0x4, offset = 0x4, fixed_abs, tag = 'smem constant byte address 0x4 - core index']
  #allocation1 [shape = 'u32[72,128]{1,0:T(1,128)}', space=vmem, size = 0x9000, scoped, tag = 'internal scratch']
  #allocation2 [shape = 'f32[32,1,128]{2,1,0:T(1,128)}', space=vmem, size = 0x4000, scoped, tag = 'scratch operand']
  #allocation3 [shape = 's32[1]{0}', space=sflag, size = 0x4, scoped, tag = 'scoped memory for _lambda_.7']
  #allocation4 [shape = 'u8[512]{0}', space=smem, size = 0x200, scoped, tag = 'prefetched SMEM operand 0']
  %s0 = inlined_call_operand.vmem [shape: s32[32], index: 0, kind: input, shape index: {}]
  %s1 = inlined_call_operand.vmem [shape: f32[32,1,128], index: 1, kind: input, shape index: {}]
  %s2 = inlined_call_operand.vmem [shape: f32[32,1,128], index: 2, kind: input, shape index: {}]
  %s3 = inlined_call_operand.vmem [shape: f32[1,1,128], index: 3, kind: input, shape index: {}]
  %s4 = inlined_call_operand.hbm [shape: f32[16,1,128], index: 4, kind: output, shape index: {}]
  %s5 = sld [smem:[#allocation0]]
  $region37: #{_lambda_.7} parent=0
    _
  %s7 = ssub.s32 1, %s5
  %s8 = scalar_select 0, %s7, %s5
  %s10 = sshll.u32 %s0, 4
  %s11 = int_to_ptr.vmem [resolvable:$true] %s10
  %13 = dma.vmem_to_smem %s11, 16, [#allocation4], [#allocation3]
  %15 = dma.done [#allocation3], 16
  %16 = sfence
  $region1: #{_lambda_.7} parent=0
    #allocation5 [shape = 'u8[8192]{0}', space=vmem, size = 0x2000, scoped, tag = 'output window, operand 0, single buffered']
    #allocation6 [shape = 's32[1]{0}', space=sflag, size = 0x4, scoped, tag = 'scoped memory for _lambda_.7']
    %17 = vsyncpa [#allocation6], 0
    // Predicated region
    $region2: #{_lambda_.7} parent=1 // pred_check
      _
    $region3: #{_lambda_.7} parent=1 // pred_check_branch
      %19 = sbr.rel (0) target = $region5
    $region4: #{_lambda_.7} parent=1 // pred_region
      _
    $region5: #{_lambda_.7} parent=1 // pred_fallthru
      _
    // Predicated region
    $region6: #{_lambda_.7} parent=1 // pred_check
      _
    $region7: #{_lambda_.7} parent=1 // pred_check_branch
      %21 = sbr.rel (0) target = $region9
    $region8: #{_lambda_.7} parent=1 // pred_region
      _
    $region9: #{_lambda_.7} parent=1 // pred_fallthru
      _
    // Predicated region
    $region10: #{_lambda_.7} parent=1 // pred_check
      _
    $region11: #{_lambda_.7} parent=1 // pred_check_branch
      %23 = sbr.rel (0) target = $region13
    $region12: #{_lambda_.7} parent=1 // pred_region
      _
    $region13: #{_lambda_.7} parent=1 // pred_fallthru
      _
    %p24 = scmp.eq.s32.totalorder 0, 0
    // Predicated region
    $region14: #{_lambda_.7} parent=1 // pred_check
      %p25 = pneg %p24
    $region15: #{_lambda_.7} parent=1 // pred_check_branch
      %27 = sbr.rel (%p25) target = $region17
    $region16: #{_lambda_.7} parent=1 // pred_region
      %28 = vst [vmem:[#allocation5] sm:$0x1] 0.0
      %29 = vst [vmem:[#allocation5 + $0x1] sm:$0x1] 0.0
      %30 = vst [vmem:[#allocation5 + $0x2] sm:$0x1] 0.0
      %31 = vst [vmem:[#allocation5 + $0x3] sm:$0x1] 0.0
      %32 = vst [vmem:[#allocation5 + $0x4] sm:$0x1] 0.0
      %33 = vst [vmem:[#allocation5 + $0x5] sm:$0x1] 0.0
      %34 = vst [vmem:[#allocation5 + $0x6] sm:$0x1] 0.0
      %35 = vst [vmem:[#allocation5 + $0x7] sm:$0x1] 0.0
      %36 = vst [vmem:[#allocation5 + $0x8] sm:$0x1] 0.0
      %37 = vst [vmem:[#allocation5 + $0x9] sm:$0x1] 0.0
      %38 = vst [vmem:[#allocation5 + $0xa] sm:$0x1] 0.0
      %39 = vst [vmem:[#allocation5 + $0xb] sm:$0x1] 0.0
      %40 = vst [vmem:[#allocation5 + $0xc] sm:$0x1] 0.0
      %41 = vst [vmem:[#allocation5 + $0xd] sm:$0x1] 0.0
      %42 = vst [vmem:[#allocation5 + $0xe] sm:$0x1] 0.0
      %43 = vst [vmem:[#allocation5 + $0xf] sm:$0x1] 0.0
    $region17: #{_lambda_.7} parent=1 // pred_fallthru
      _
    %v44 = vld [vmem:[%s1] sm:$0x1]
    %v45 = vld [vmem:[%s1 + $0x1] sm:$0x1]
    %v46 = vld [vmem:[%s1 + $0x2] sm:$0x1]
    %v47 = vld [vmem:[%s1 + $0x3] sm:$0x1]
    %v48 = vld [vmem:[%s1 + $0x4] sm:$0x1]
    %v49 = vld [vmem:[%s1 + $0x5] sm:$0x1]
    %v50 = vld [vmem:[%s1 + $0x6] sm:$0x1]
    %v51 = vld [vmem:[%s1 + $0x7] sm:$0x1]
    %v52 = vld [vmem:[%s1 + $0x8] sm:$0x1]
    %v53 = vld [vmem:[%s1 + $0x9] sm:$0x1]
    %v54 = vld [vmem:[%s1 + $0xa] sm:$0x1]
    %v55 = vld [vmem:[%s1 + $0xb] sm:$0x1]
    %v56 = vld [vmem:[%s1 + $0xc] sm:$0x1]
    %v57 = vld [vmem:[%s1 + $0xd] sm:$0x1]
    %v58 = vld [vmem:[%s1 + $0xe] sm:$0x1]
    %v59 = vld [vmem:[%s1 + $0xf] sm:$0x1]
    %v60 = vld [vmem:[%s1 + $0x10] sm:$0x1]
    %v61 = vld [vmem:[%s1 + $0x11] sm:$0x1]
    %v62 = vld [vmem:[%s1 + $0x12] sm:$0x1]
    %v63 = vld [vmem:[%s1 + $0x13] sm:$0x1]
    %v64 = vld [vmem:[%s1 + $0x14] sm:$0x1]
    %v65 = vld [vmem:[%s1 + $0x15] sm:$0x1]
    %v66 = vld [vmem:[%s1 + $0x16] sm:$0x1]
    %v67 = vld [vmem:[%s1 + $0x17] sm:$0x1]
    %v68 = vld [vmem:[%s1 + $0x18] sm:$0x1]
    %v69 = vld [vmem:[%s1 + $0x19] sm:$0x1]
    %v70 = vld [vmem:[%s1 + $0x1a] sm:$0x1]
    %v71 = vld [vmem:[%s1 + $0x1b] sm:$0x1]
    %v72 = vld [vmem:[%s1 + $0x1c] sm:$0x1]
    %v73 = vld [vmem:[%s1 + $0x1d] sm:$0x1]
    %v74 = vld [vmem:[%s1 + $0x1e] sm:$0x1]
    %v75 = vld [vmem:[%s1 + $0x1f] sm:$0x1]
    %v76 = vld [vmem:[%s2] sm:$0x1]
    %v77 = vld [vmem:[%s2 + $0x1] sm:$0x1]
    %v78 = vld [vmem:[%s2 + $0x2] sm:$0x1]
    %v79 = vld [vmem:[%s2 + $0x3] sm:$0x1]
    %v80 = vld [vmem:[%s2 + $0x4] sm:$0x1]
    %v81 = vld [vmem:[%s2 + $0x5] sm:$0x1]
    %v82 = vld [vmem:[%s2 + $0x6] sm:$0x1]
    %v83 = vld [vmem:[%s2 + $0x7] sm:$0x1]
    %v84 = vld [vmem:[%s2 + $0x8] sm:$0x1]
    %v85 = vld [vmem:[%s2 + $0x9] sm:$0x1]
    %v86 = vld [vmem:[%s2 + $0xa] sm:$0x1]
    %v87 = vld [vmem:[%s2 + $0xb] sm:$0x1]
    %v88 = vld [vmem:[%s2 + $0xc] sm:$0x1]
    %v89 = vld [vmem:[%s2 + $0xd] sm:$0x1]
    %v90 = vld [vmem:[%s2 + $0xe] sm:$0x1]
    %v91 = vld [vmem:[%s2 + $0xf] sm:$0x1]
    %v92 = vld [vmem:[%s2 + $0x10] sm:$0x1]
    %v93 = vld [vmem:[%s2 + $0x11] sm:$0x1]
    %v94 = vld [vmem:[%s2 + $0x12] sm:$0x1]
    %v95 = vld [vmem:[%s2 + $0x13] sm:$0x1]
    %v96 = vld [vmem:[%s2 + $0x14] sm:$0x1]
    %v97 = vld [vmem:[%s2 + $0x15] sm:$0x1]
    %v98 = vld [vmem:[%s2 + $0x16] sm:$0x1]
    %v99 = vld [vmem:[%s2 + $0x17] sm:$0x1]
    %v100 = vld [vmem:[%s2 + $0x18] sm:$0x1]
    %v101 = vld [vmem:[%s2 + $0x19] sm:$0x1]
    %v102 = vld [vmem:[%s2 + $0x1a] sm:$0x1]
    %v103 = vld [vmem:[%s2 + $0x1b] sm:$0x1]
    %v104 = vld [vmem:[%s2 + $0x1c] sm:$0x1]
    %v105 = vld [vmem:[%s2 + $0x1d] sm:$0x1]
    %v106 = vld [vmem:[%s2 + $0x1e] sm:$0x1]
    %v107 = vld [vmem:[%s2 + $0x1f] sm:$0x1]
    %v108 = vmul.f32 %v44, %v76
    %v109 = vmul.f32 %v45, %v77
    %v110 = vmul.f32 %v46, %v78
    %v111 = vmul.f32 %v47, %v79
    %v112 = vmul.f32 %v48, %v80
    %v113 = vmul.f32 %v49, %v81
    %v114 = vmul.f32 %v50, %v82
    %v115 = vmul.f32 %v51, %v83
    %v116 = vmul.f32 %v52, %v84
    %v117 = vmul.f32 %v53, %v85
    %v118 = vmul.f32 %v54, %v86
    %v119 = vmul.f32 %v55, %v87
    %v120 = vmul.f32 %v56, %v88
    %v121 = vmul.f32 %v57, %v89
    %v122 = vmul.f32 %v58, %v90
    %v123 = vmul.f32 %v59, %v91
    %v124 = vmul.f32 %v60, %v92
    %v125 = vmul.f32 %v61, %v93
    %v126 = vmul.f32 %v62, %v94
    %v127 = vmul.f32 %v63, %v95
    %v128 = vmul.f32 %v64, %v96
    %v129 = vmul.f32 %v65, %v97
    %v130 = vmul.f32 %v66, %v98
    %v131 = vmul.f32 %v67, %v99
    %v132 = vmul.f32 %v68, %v100
    %v133 = vmul.f32 %v69, %v101
    %v134 = vmul.f32 %v70, %v102
    %v135 = vmul.f32 %v71, %v103
    %v136 = vmul.f32 %v72, %v104
    %v137 = vmul.f32 %v73, %v105
    %v138 = vmul.f32 %v74, %v106
    %v139 = vmul.f32 %v75, %v107
    %140 = vst [vmem:[#allocation2] sm:$0x1] %v108
    %141 = vst [vmem:[#allocation2 + $0x1] sm:$0x1] %v109
    %142 = vst [vmem:[#allocation2 + $0x2] sm:$0x1] %v110
    %143 = vst [vmem:[#allocation2 + $0x3] sm:$0x1] %v111
    %144 = vst [vmem:[#allocation2 + $0x4] sm:$0x1] %v112
    %145 = vst [vmem:[#allocation2 + $0x5] sm:$0x1] %v113
    %146 = vst [vmem:[#allocation2 + $0x6] sm:$0x1] %v114
    %147 = vst [vmem:[#allocation2 + $0x7] sm:$0x1] %v115
    %148 = vst [vmem:[#allocation2 + $0x8] sm:$0x1] %v116
    %149 = vst [vmem:[#allocation2 + $0x9] sm:$0x1] %v117
    %150 = vst [vmem:[#allocation2 + $0xa] sm:$0x1] %v118
    %151 = vst [vmem:[#allocation2 + $0xb] sm:$0x1] %v119
    %152 = vst [vmem:[#allocation2 + $0xc] sm:$0x1] %v120
    %153 = vst [vmem:[#allocation2 + $0xd] sm:$0x1] %v121
    %154 = vst [vmem:[#allocation2 + $0xe] sm:$0x1] %v122
    %155 = vst [vmem:[#allocation2 + $0xf] sm:$0x1] %v123
    %156 = vst [vmem:[#allocation2 + $0x10] sm:$0x1] %v124
    %157 = vst [vmem:[#allocation2 + $0x11] sm:$0x1] %v125
    %158 = vst [vmem:[#allocation2 + $0x12] sm:$0x1] %v126
    %159 = vst [vmem:[#allocation2 + $0x13] sm:$0x1] %v127
    %160 = vst [vmem:[#allocation2 + $0x14] sm:$0x1] %v128
    %161 = vst [vmem:[#allocation2 + $0x15] sm:$0x1] %v129
    %162 = vst [vmem:[#allocation2 + $0x16] sm:$0x1] %v130
    %163 = vst [vmem:[#allocation2 + $0x17] sm:$0x1] %v131
    %164 = vst [vmem:[#allocation2 + $0x18] sm:$0x1] %v132
    %165 = vst [vmem:[#allocation2 + $0x19] sm:$0x1] %v133
    %166 = vst [vmem:[#allocation2 + $0x1a] sm:$0x1] %v134
    %167 = vst [vmem:[#allocation2 + $0x1b] sm:$0x1] %v135
    %168 = vst [vmem:[#allocation2 + $0x1c] sm:$0x1] %v136
    %169 = vst [vmem:[#allocation2 + $0x1d] sm:$0x1] %v137
    %170 = vst [vmem:[#allocation2 + $0x1e] sm:$0x1] %v138
    %171 = vst [vmem:[#allocation2 + $0x1f] sm:$0x1] %v139
    %s172 = smul.u32 0, 32
    loop: start=0, step=1, limit=32
    $region18: #{_lambda_.7} parent=1 // loop_pre_header
      _
    $region19: #{_lambda_.7} parent=1 // loop_header
      %s174 = sphi 0, %s178
      %p175 = scmp.ge.s32.totalorder %s174, 32
    $region20: #{_lambda_.7} parent=1 // loop_header_branch
      %177 = sbr.rel (%p175) target = $region24
    $region21: #{_lambda_.7} parent=1 // loop_body
      %s179 = sadd.s32 %s172, %s174
      %s180 = sld [smem:[#allocation4 + %s179]]
      %s181 = scalar_lea.vmem [#allocation5], %s180
      %v182 = vld [vmem:[%s181] sm:$0x1]
      %s183 = scalar_lea.vmem [#allocation2], %s174
      %v184 = vld [vmem:[%s183] sm:$0x1]
      %v185 = vadd.f32 %v182, %v184
      %186 = vst [vmem:[%s181] sm:$0x1] %v185
    $region22: #{_lambda_.7} parent=1 // loop_footer
      %s178 = sadd.s32 1, %s174
    $region23: #{_lambda_.7} parent=1 // loop_footer_branch
      %173 = sbr.rel target = $region19
    $region24: #{_lambda_.7} parent=1 // loop_exit
      _
    // Predicated region
    $region25: #{_lambda_.7} parent=1 // pred_check
      %p187 = pneg %p24
    $region26: #{_lambda_.7} parent=1 // pred_check_branch
      %189 = sbr.rel (%p187) target = $region28
    $region27: #{_lambda_.7} parent=1 // pred_region
      %v190 = vld [vmem:[#allocation5] sm:$0x1]
      %v191 = vld [vmem:[#allocation5 + $0x1] sm:$0x1]
      %v192 = vld [vmem:[#allocation5 + $0x2] sm:$0x1]
      %v193 = vld [vmem:[#allocation5 + $0x3] sm:$0x1]
      %v194 = vld [vmem:[#allocation5 + $0x4] sm:$0x1]
      %v195 = vld [vmem:[#allocation5 + $0x5] sm:$0x1]
      %v196 = vld [vmem:[#allocation5 + $0x6] sm:$0x1]
      %v197 = vld [vmem:[#allocation5 + $0x7] sm:$0x1]
      %v198 = vld [vmem:[#allocation5 + $0x8] sm:$0x1]
      %v199 = vld [vmem:[#allocation5 + $0x9] sm:$0x1]
      %v200 = vld [vmem:[#allocation5 + $0xa] sm:$0x1]
      %v201 = vld [vmem:[#allocation5 + $0xb] sm:$0x1]
      %v202 = vld [vmem:[#allocation5 + $0xc] sm:$0x1]
      %v203 = vld [vmem:[#allocation5 + $0xd] sm:$0x1]
      %v204 = vld [vmem:[#allocation5 + $0xe] sm:$0x1]
      %v205 = vld [vmem:[#allocation5 + $0xf] sm:$0x1]
      %v206 = vld [vmem:[%s3] sm:$0x1]
      %v207 = vadd.f32 %v190, %v206
      %v208 = vadd.f32 %v191, %v206
      %v209 = vadd.f32 %v192, %v206
      %v210 = vadd.f32 %v193, %v206
      %v211 = vadd.f32 %v194, %v206
      %v212 = vadd.f32 %v195, %v206
      %v213 = vadd.f32 %v196, %v206
      %v214 = vadd.f32 %v197, %v206
      %v215 = vadd.f32 %v198, %v206
      %v216 = vadd.f32 %v199, %v206
      %v217 = vadd.f32 %v200, %v206
      %v218 = vadd.f32 %v201, %v206
      %v219 = vadd.f32 %v202, %v206
      %v220 = vadd.f32 %v203, %v206
      %v221 = vadd.f32 %v204, %v206
      %v222 = vadd.f32 %v205, %v206
      %223 = vst [vmem:[#allocation5] sm:$0x1] %v207
      %224 = vst [vmem:[#allocation5 + $0x1] sm:$0x1] %v208
      %225 = vst [vmem:[#allocation5 + $0x2] sm:$0x1] %v209
      %226 = vst [vmem:[#allocation5 + $0x3] sm:$0x1] %v210
      %227 = vst [vmem:[#allocation5 + $0x4] sm:$0x1] %v211
      %228 = vst [vmem:[#allocation5 + $0x5] sm:$0x1] %v212
      %229 = vst [vmem:[#allocation5 + $0x6] sm:$0x1] %v213
      %230 = vst [vmem:[#allocation5 + $0x7] sm:$0x1] %v214
      %231 = vst [vmem:[#allocation5 + $0x8] sm:$0x1] %v215
      %232 = vst [vmem:[#allocation5 + $0x9] sm:$0x1] %v216
      %233 = vst [vmem:[#allocation5 + $0xa] sm:$0x1] %v217
      %234 = vst [vmem:[#allocation5 + $0xb] sm:$0x1] %v218
      %235 = vst [vmem:[#allocation5 + $0xc] sm:$0x1] %v219
      %236 = vst [vmem:[#allocation5 + $0xd] sm:$0x1] %v220
      %237 = vst [vmem:[#allocation5 + $0xe] sm:$0x1] %v221
      %238 = vst [vmem:[#allocation5 + $0xf] sm:$0x1] %v222
    $region28: #{_lambda_.7} parent=1 // pred_fallthru
      _
    // Predicated region
    $region29: #{_lambda_.7} parent=1 // pred_check
      _
    $region30: #{_lambda_.7} parent=1 // pred_check_branch
      %240 = sbr.rel (0) target = $region32
    $region31: #{_lambda_.7} parent=1 // pred_region
      %242 = vsyncadd [#allocation6], 0
      %s243 = sshll.u32 [#allocation5], 4
      %s244 = int_to_ptr.vmem [resolvable:$true] %s243
      %s245 = sshll.u32 %s4, 4
      %s246 = int_to_ptr.hbm [resolvable:$true] %s245
      %251 = dma.vmem_to_hbm [thread:$0]  %s244, 256, %s246, [#allocation6], 16, 16, 1
    $region32: #{_lambda_.7} parent=1 // pred_fallthru
      _
    // Predicated region
    $region33: #{_lambda_.7} parent=1 // pred_check
      _
    $region34: #{_lambda_.7} parent=1 // pred_check_branch
      %253 = sbr.rel (0) target = $region36
    $region35: #{_lambda_.7} parent=1 // pred_region
      %255 = dma.done [#allocation6], 256
    $region36: #{_lambda_.7} parent=1 // pred_fallthru
      _
    %256 = vsyncpa [#allocation6], 1

</llo_original>
